<compile_context>
chip_gen: v7x
topology: tpu7x:2x2x1
jax: 0.10.0
libtpu: 0.0.40
codegen_flags: <defaults>
</compile_context>

<pallas_src>
import jax
import jax.numpy as jnp
from jax.experimental import pallas as pl
from jax.experimental.pallas import tpu as pltpu

H1, H2, H3 = 128, 256, 256  # hidden sizes from the PyTorch module
LANE = 128


def _round_up(n, m):
    return ((n + m - 1) // m) * m


def mlp_kernel(x_ref, w1_ref, b1_ref, w2_ref, b2_ref, w3_ref, b3_ref,
               w4_ref, b4_ref, o_ref):
    # Whole MLP hot path: 4 MXU matmuls (bf16 operands, f32 accumulate) + f32 bias/ReLU.
    h = jnp.dot(x_ref[...].astype(jnp.bfloat16), w1_ref[...],
                preferred_element_type=jnp.float32) + b1_ref[...]
    h = jnp.maximum(h, 0.0)
    h = jnp.dot(h.astype(jnp.bfloat16), w2_ref[...],
                preferred_element_type=jnp.float32) + b2_ref[...]
    h = jnp.maximum(h, 0.0)
    h = jnp.dot(h.astype(jnp.bfloat16), w3_ref[...],
                preferred_element_type=jnp.float32) + b3_ref[...]
    h = jnp.maximum(h, 0.0)
    y = jnp.dot(h.astype(jnp.bfloat16), w4_ref[...],
                preferred_element_type=jnp.float32) + b4_ref[...]
    o_ref[...] = y.astype(o_ref.dtype)


def simple_nn_forward(x, params, *, bm=128):
    """x: [B, input_size] float32; params: dict of f32 weights [in,out] / biases [1,out]."""
    B, F = x.shape
    num_classes = params["w4"].shape[1]

    # Lane-dense padding: features and classes up to multiples of 128, batch up to a
    # multiple of the batch tile. Zero rows/cols keep the math exact; the wrapper slices
    # the padding off the output.
    Fp = _round_up(F, LANE)
    Cp = _round_up(num_classes, LANE)
    Bp = _round_up(B, bm)

    xp = jnp.pad(x.astype(jnp.float32), ((0, Bp - B), (0, Fp - F)))
    w1 = jnp.pad(params["w1"], ((0, Fp - F), (0, 0))).astype(jnp.bfloat16)
    w2 = params["w2"].astype(jnp.bfloat16)
    w3 = params["w3"].astype(jnp.bfloat16)
    w4 = jnp.pad(params["w4"], ((0, 0), (0, Cp - num_classes))).astype(jnp.bfloat16)
    b1 = params["b1"].astype(jnp.float32)
    b2 = params["b2"].astype(jnp.float32)
    b3 = params["b3"].astype(jnp.float32)
    b4 = jnp.pad(params["b4"], ((0, 0), (0, Cp - num_classes))).astype(jnp.float32)

    grid = (Bp // bm,)  # >= 2 steps for real batches -> both v7x TensorCores busy

    def full(shape):  # whole weight/bias block, constant index across the batch grid
        return pl.BlockSpec(shape, lambda i: (0,) * len(shape))

    flops = 2 * Bp * (Fp * H1 + H1 * H2 + H2 * H3 + H3 * Cp)
    bytes_accessed = (xp.size * 4 + Bp * Cp * 4
                      + (w1.size + w2.size + w3.size + w4.size) * 2
                      + (b1.size + b2.size + b3.size + b4.size) * 4)

    out = pl.pallas_call(
        mlp_kernel,
        out_shape=jax.ShapeDtypeStruct((Bp, Cp), jnp.float32),
        grid_spec=pltpu.PrefetchScalarGridSpec(
            num_scalar_prefetch=0,
            grid=grid,
            in_specs=[
                pl.BlockSpec((bm, Fp), lambda i: (i, 0)),   # x tile over batch
                full((Fp, H1)), full((1, H1)),
                full((H1, H2)), full((1, H2)),
                full((H2, H3)), full((1, H3)),
                full((H3, Cp)), full((1, Cp)),
            ],
            out_specs=pl.BlockSpec((bm, Cp), lambda i: (i, 0)),
        ),
        compiler_params=pltpu.CompilerParams(
            dimension_semantics=("parallel",)),
        cost_estimate=pl.CostEstimate(flops=flops, transcendentals=0,
                                      bytes_accessed=bytes_accessed),
    )(xp, w1, b1, w2, b2, w3, b3, w4, b4)

    return out[:B, :num_classes]


def init_params(key, input_size, num_classes):
    """Deterministic init mirroring nn.Linear's U(-1/sqrt(fan_in), 1/sqrt(fan_in))."""
    dims = [(input_size, H1), (H1, H2), (H2, H3), (H3, num_classes)]
    params = {}
    keys = jax.random.split(key, 2 * len(dims))
    for idx, (fan_in, fan_out) in enumerate(dims):
        bound = 1.0 / jnp.sqrt(float(fan_in))
        w = jax.random.uniform(keys[2 * idx], (fan_in, fan_out),
                               minval=-bound, maxval=bound, dtype=jnp.float32)
        b = jax.random.uniform(keys[2 * idx + 1], (1, fan_out),
                               minval=-bound, maxval=bound, dtype=jnp.float32)
        params[f"w{idx + 1}"] = w
        params[f"b{idx + 1}"] = b
    return params


def reference_forward(x, p):
    # Same bf16-operand / f32-accumulate recipe as the kernel, plain JAX.
    def mm(a, w):
        return jnp.dot(a.astype(jnp.bfloat16), w.astype(jnp.bfloat16),
                       preferred_element_type=jnp.float32)
    h = jnp.maximum(mm(x, p["w1"]) + p["b1"], 0.0)
    h = jnp.maximum(mm(h, p["w2"]) + p["b2"], 0.0)
    h = jnp.maximum(mm(h, p["w3"]) + p["b3"], 0.0)
    return mm(h, p["w4"]) + p["b4"]


if __name__ == "__main__":
    # Small synthetic tabular problem: 256 rows x 32 features, 10 classes.
    # batch=256 with bm=128 gives a 2-step parallel grid (exercises v7x megacore).
    batch, input_size, num_classes = 256, 32, 10

    key = jax.random.PRNGKey(0)
    k_x, k_p = jax.random.split(key)
    x = jax.random.normal(k_x, (batch, input_size), dtype=jnp.float32)
    params = init_params(k_p, input_size, num_classes)

    out = simple_nn_forward(x, params)
    out = jax.block_until_ready(out)

    ref = reference_forward(x, params)
    assert out.shape == (batch, num_classes)
    assert jnp.allclose(out, ref, atol=1e-2, rtol=1e-2), "mismatch vs JAX reference"

    print("KERNEL_OK")
</pallas_src>

<mosaic_0001>
module attributes {stable_mosaic.version = 11 : i64} {
  func.func @mlp_kernel(%arg0: i32, %arg1: memref<128x128xf32, #tpu.memory_space<vmem>>, %arg2: memref<128x128xbf16, #tpu.memory_space<vmem>>, %arg3: memref<1x128xf32, #tpu.memory_space<vmem>>, %arg4: memref<128x256xbf16, #tpu.memory_space<vmem>>, %arg5: memref<1x256xf32, #tpu.memory_space<vmem>>, %arg6: memref<256x256xbf16, #tpu.memory_space<vmem>>, %arg7: memref<1x256xf32, #tpu.memory_space<vmem>>, %arg8: memref<256x128xbf16, #tpu.memory_space<vmem>>, %arg9: memref<1x128xf32, #tpu.memory_space<vmem>>, %arg10: memref<128x128xf32, #tpu.memory_space<vmem>>) attributes {dimension_semantics = [#tpu.dimension_semantics<parallel>], iteration_bounds = array<i64: 2>, scalar_prefetch = 0 : i64, scratch_operands = 0 : i64, tpu.core_type = #tpu.core_type<tc>, window_params = [{transform_indices = @transform_0, window_bounds = array<i64: 128, 128>}, {pipeline_mode = #tpu.pipeline_mode<synchronous>, transform_indices = @transform_1, window_bounds = array<i64: 128, 128>}, {pipeline_mode = #tpu.pipeline_mode<synchronous>, transform_indices = @transform_2, window_bounds = array<i64: 1, 128>}, {pipeline_mode = #tpu.pipeline_mode<synchronous>, transform_indices = @transform_3, window_bounds = array<i64: 128, 256>}, {pipeline_mode = #tpu.pipeline_mode<synchronous>, transform_indices = @transform_4, window_bounds = array<i64: 1, 256>}, {pipeline_mode = #tpu.pipeline_mode<synchronous>, transform_indices = @transform_5, window_bounds = array<i64: 256, 256>}, {pipeline_mode = #tpu.pipeline_mode<synchronous>, transform_indices = @transform_6, window_bounds = array<i64: 1, 256>}, {pipeline_mode = #tpu.pipeline_mode<synchronous>, transform_indices = @transform_7, window_bounds = array<i64: 256, 128>}, {pipeline_mode = #tpu.pipeline_mode<synchronous>, transform_indices = @transform_8, window_bounds = array<i64: 1, 128>}, {transform_indices = @transform_9, window_bounds = array<i64: 128, 128>}]} {
    %c0 = arith.constant 0 : index
    %c0_0 = arith.constant 0 : index
    %0 = vector.load %arg1[%c0, %c0_0] : memref<128x128xf32, #tpu.memory_space<vmem>>, vector<128x128xf32>
    %1 = arith.truncf %0 : vector<128x128xf32> to vector<128x128xbf16>
    %c0_1 = arith.constant 0 : index
    %c0_2 = arith.constant 0 : index
    %2 = vector.load %arg2[%c0_1, %c0_2] : memref<128x128xbf16, #tpu.memory_space<vmem>>, vector<128x128xbf16>
    %cst = arith.constant dense<0.000000e+00> : vector<128x128xf32>
    %3 = tpu.matmul %1, %2, %cst {dimension_numbers = #tpu.dot_dimension_numbers<[1], [0], [0], [1], [0, 0, 1, 1], [], []>} : vector<128x128xbf16>, vector<128x128xbf16>, vector<128x128xf32> -> vector<128x128xf32>
    %c0_3 = arith.constant 0 : index
    %c0_4 = arith.constant 0 : index
    %4 = vector.load %arg3[%c0_3, %c0_4] : memref<1x128xf32, #tpu.memory_space<vmem>>, vector<1x128xf32>
    %5 = vector.broadcast %4 : vector<1x128xf32> to vector<128x128xf32>
    %6 = arith.addf %3, %5 : vector<128x128xf32>
    %cst_5 = arith.constant 0.000000e+00 : f32
    %7 = vector.broadcast %cst_5 : f32 to vector<128x128xf32>
    %8 = arith.maximumf %6, %7 : vector<128x128xf32>
    %9 = arith.truncf %8 : vector<128x128xf32> to vector<128x128xbf16>
    %c0_6 = arith.constant 0 : index
    %c0_7 = arith.constant 0 : index
    %10 = vector.load %arg4[%c0_6, %c0_7] : memref<128x256xbf16, #tpu.memory_space<vmem>>, vector<128x256xbf16>
    %cst_8 = arith.constant dense<0.000000e+00> : vector<128x256xf32>
    %11 = tpu.matmul %9, %10, %cst_8 {dimension_numbers = #tpu.dot_dimension_numbers<[1], [0], [0], [1], [0, 0, 1, 1], [], []>} : vector<128x128xbf16>, vector<128x256xbf16>, vector<128x256xf32> -> vector<128x256xf32>
    %c0_9 = arith.constant 0 : index
    %c0_10 = arith.constant 0 : index
    %12 = vector.load %arg5[%c0_9, %c0_10] : memref<1x256xf32, #tpu.memory_space<vmem>>, vector<1x256xf32>
    %13 = vector.broadcast %12 : vector<1x256xf32> to vector<128x256xf32>
    %14 = arith.addf %11, %13 : vector<128x256xf32>
    %cst_11 = arith.constant 0.000000e+00 : f32
    %15 = vector.broadcast %cst_11 : f32 to vector<128x256xf32>
    %16 = arith.maximumf %14, %15 : vector<128x256xf32>
    %17 = arith.truncf %16 : vector<128x256xf32> to vector<128x256xbf16>
    %c0_12 = arith.constant 0 : index
    %c0_13 = arith.constant 0 : index
    %18 = vector.load %arg6[%c0_12, %c0_13] : memref<256x256xbf16, #tpu.memory_space<vmem>>, vector<256x256xbf16>
    %cst_14 = arith.constant dense<0.000000e+00> : vector<128x256xf32>
    %19 = tpu.matmul %17, %18, %cst_14 {dimension_numbers = #tpu.dot_dimension_numbers<[1], [0], [0], [1], [0, 0, 1, 1], [], []>} : vector<128x256xbf16>, vector<256x256xbf16>, vector<128x256xf32> -> vector<128x256xf32>
    %c0_15 = arith.constant 0 : index
    %c0_16 = arith.constant 0 : index
    %20 = vector.load %arg7[%c0_15, %c0_16] : memref<1x256xf32, #tpu.memory_space<vmem>>, vector<1x256xf32>
    %21 = vector.broadcast %20 : vector<1x256xf32> to vector<128x256xf32>
    %22 = arith.addf %19, %21 : vector<128x256xf32>
    %cst_17 = arith.constant 0.000000e+00 : f32
    %23 = vector.broadcast %cst_17 : f32 to vector<128x256xf32>
    %24 = arith.maximumf %22, %23 : vector<128x256xf32>
    %25 = arith.truncf %24 : vector<128x256xf32> to vector<128x256xbf16>
    %c0_18 = arith.constant 0 : index
    %c0_19 = arith.constant 0 : index
    %26 = vector.load %arg8[%c0_18, %c0_19] : memref<256x128xbf16, #tpu.memory_space<vmem>>, vector<256x128xbf16>
    %cst_20 = arith.constant dense<0.000000e+00> : vector<128x128xf32>
    %27 = tpu.matmul %25, %26, %cst_20 {dimension_numbers = #tpu.dot_dimension_numbers<[1], [0], [0], [1], [0, 0, 1, 1], [], []>} : vector<128x256xbf16>, vector<256x128xbf16>, vector<128x128xf32> -> vector<128x128xf32>
    %c0_21 = arith.constant 0 : index
    %c0_22 = arith.constant 0 : index
    %28 = vector.load %arg9[%c0_21, %c0_22] : memref<1x128xf32, #tpu.memory_space<vmem>>, vector<1x128xf32>
    %29 = vector.broadcast %28 : vector<1x128xf32> to vector<128x128xf32>
    %30 = arith.addf %27, %29 : vector<128x128xf32>
    %c0_23 = arith.constant 0 : index
    %c0_24 = arith.constant 0 : index
    %31 = vector.load %arg10[%c0_23, %c0_24] : memref<128x128xf32, #tpu.memory_space<vmem>>, vector<128x128xf32>
    tpu.vector_store %arg10[%c0_23, %c0_24], %30 {strides = array<i32>} : memref<128x128xf32, #tpu.memory_space<vmem>>, vector<128x128xf32>,
    return
  }
  func.func @transform_0(%arg0: i32) -> (i32, i32) {
    %c0_i32 = arith.constant 0 : i32
    %c0_i32_0 = arith.constant 0 : i32
    return %arg0, %c0_i32 : i32, i32
  }
  func.func @transform_1(%arg0: i32) -> (i32, i32) {
    %c0_i32 = arith.constant 0 : i32
    %c0_i32_0 = arith.constant 0 : i32
    %c0_i32_1 = arith.constant 0 : i32
    return %c0_i32, %c0_i32_0 : i32, i32
  }
  func.func @transform_2(%arg0: i32) -> (i32, i32) {
    %c0_i32 = arith.constant 0 : i32
    %c0_i32_0 = arith.constant 0 : i32
    %c0_i32_1 = arith.constant 0 : i32
    return %c0_i32, %c0_i32_0 : i32, i32
  }
  func.func @transform_3(%arg0: i32) -> (i32, i32) {
    %c0_i32 = arith.constant 0 : i32
    %c0_i32_0 = arith.constant 0 : i32
    %c0_i32_1 = arith.constant 0 : i32
    return %c0_i32, %c0_i32_0 : i32, i32
  }
  func.func @transform_4(%arg0: i32) -> (i32, i32) {
    %c0_i32 = arith.constant 0 : i32
    %c0_i32_0 = arith.constant 0 : i32
    %c0_i32_1 = arith.constant 0 : i32
    return %c0_i32, %c0_i32_0 : i32, i32
  }
  func.func @transform_5(%arg0: i32) -> (i32, i32) {
    %c0_i32 = arith.constant 0 : i32
    %c0_i32_0 = arith.constant 0 : i32
    %c0_i32_1 = arith.constant 0 : i32
    return %c0_i32, %c0_i32_0 : i32, i32
  }
  func.func @transform_6(%arg0: i32) -> (i32, i32) {
    %c0_i32 = arith.constant 0 : i32
    %c0_i32_0 = arith.constant 0 : i32
    %c0_i32_1 = arith.constant 0 : i32
    return %c0_i32, %c0_i32_0 : i32, i32
  }
  func.func @transform_7(%arg0: i32) -> (i32, i32) {
    %c0_i32 = arith.constant 0 : i32
    %c0_i32_0 = arith.constant 0 : i32
    %c0_i32_1 = arith.constant 0 : i32
    return %c0_i32, %c0_i32_0 : i32, i32
  }
  func.func @transform_8(%arg0: i32) -> (i32, i32) {
    %c0_i32 = arith.constant 0 : i32
    %c0_i32_0 = arith.constant 0 : i32
    %c0_i32_1 = arith.constant 0 : i32
    return %c0_i32, %c0_i32_0 : i32, i32
  }
  func.func @transform_9(%arg0: i32) -> (i32, i32) {
    %c0_i32 = arith.constant 0 : i32
    %c0_i32_0 = arith.constant 0 : i32
    return %arg0, %c0_i32 : i32, i32
  }
}

</mosaic_0001>

<llo_original>
// kernel: tpu_custom_call.1
$region0: #{tpu_custom_call.1}
  #allocation0 [shape = 'u32[]', space=smem, size = 0x4, offset = 0x4, fixed_abs, tag = 'smem constant byte address 0x4 - core index']
  #allocation1 [shape = 'u32[144,128]{1,0:T(1,128)}', space=vmem, size = 0x12000, scoped, tag = 'internal scratch']
  %s0 = inlined_call_operand.hbm [shape: f32[256,128], index: 0, kind: input, shape index: {}]
  %s1 = inlined_call_operand.hbm [shape: bf16[128,128], index: 1, kind: input, shape index: {}]
  %s2 = inlined_call_operand.vmem [shape: f32[1,128], index: 2, kind: input, shape index: {}]
  %s3 = inlined_call_operand.hbm [shape: bf16[128,256], index: 3, kind: input, shape index: {}]
  %s4 = inlined_call_operand.vmem [shape: f32[1,256], index: 4, kind: input, shape index: {}]
  %s5 = inlined_call_operand.hbm [shape: bf16[256,256], index: 5, kind: input, shape index: {}]
  %s6 = inlined_call_operand.vmem [shape: f32[1,256], index: 6, kind: input, shape index: {}]
  %s7 = inlined_call_operand.hbm [shape: bf16[256,128], index: 7, kind: input, shape index: {}]
  %s8 = inlined_call_operand.vmem [shape: f32[1,128], index: 8, kind: input, shape index: {}]
  %s9 = inlined_call_operand.hbm [shape: f32[256,128], index: 9, kind: output, shape index: {}]
  %s10 = sld [smem:[#allocation0]]
  $region89: #{tpu_custom_call.1} parent=0
    _
  %s12 = ssub.s32 1, %s10
  %s13 = scalar_select 0, %s12, %s10
  $region1: #{tpu_custom_call.1} parent=0
    #allocation2 [shape = 'u8[131072]{0}', space=vmem, size = 0x20000, scoped, tag = 'input window, operand 0']
    #allocation3 [shape = 's32[2]{0}', space=sflag, size = 0x8, scoped, tag = 'scoped memory for tpu_custom_call.1']
    #allocation4 [shape = 's32[2]{0}', space=sflag, size = 0x8, scoped, tag = 'scoped memory for tpu_custom_call.1']
    #allocation5 [shape = 'u8[32768]{0}', space=vmem, size = 0x8000, scoped, tag = 'input window, operand 1, single buffered']
    #allocation6 [shape = 's32[1]{0}', space=sflag, size = 0x4, scoped, tag = 'scoped memory for tpu_custom_call.1']
    #allocation7 [shape = 'u8[65536]{0}', space=vmem, size = 0x10000, scoped, tag = 'input window, operand 3, single buffered']
    #allocation8 [shape = 'u8[131072]{0}', space=vmem, size = 0x20000, scoped, tag = 'input window, operand 5, single buffered']
    #allocation9 [shape = 's32[1]{0}', space=sflag, size = 0x4, scoped, tag = 'scoped memory for tpu_custom_call.1']
    #allocation10 [shape = 'u8[65536]{0}', space=vmem, size = 0x10000, scoped, tag = 'input window, operand 7, single buffered']
    #allocation11 [shape = 'u8[131072]{0}', space=vmem, size = 0x20000, scoped, tag = 'output window, operand 0']
    %14 = vsyncpa [#allocation3], 0
    %s15 = scalar_lea.sflag [#allocation3], 1
    %16 = vsyncpa %s15, 0
    %17 = vsyncpa [#allocation6], 0
    %18 = vsyncpa [#allocation9], 0
    %19 = vsyncpa [#allocation4], 0
    %s20 = scalar_lea.sflag [#allocation4], 1
    %21 = vsyncpa %s20, 0
    loop: start=0, step=1, limit=4
    $region2: #{tpu_custom_call.1} parent=1 // loop_pre_header
      _
    $region3: #{tpu_custom_call.1} parent=1 // loop_header
      %s23 = sphi 0, %s27
      %p24 = scmp.ge.s32.totalorder %s23, 4
      %s33 = sphi 0, %s35
      %s36 = sphi 0, %s33
      %s37 = sphi 0, %s36
      %s53 = sphi 0, %s37
      %s57 = sphi 0, %s57
      %s59 = sphi 0, %s57
      %s60 = sphi 0, %s59
      %s74 = sphi 0, %s60
      %s78 = sphi 0, %s78
      %s80 = sphi 0, %s78
      %s81 = sphi 0, %s80
      %s95 = sphi 0, %s81
      %s99 = sphi 0, %s99
      %s101 = sphi 0, %s99
      %s102 = sphi 0, %s101
      %s116 = sphi 0, %s102
      %s120 = sphi 0, %s120
      %s122 = sphi 0, %s120
      %s123 = sphi 0, %s122
      %s137 = sphi 0, %s123
      %s141 = sphi 0, %s141
      %s143 = sphi 0, %s141
      %s144 = sphi 0, %s143
      %s158 = sphi 0, %s144
      %s162 = sphi 0, %s162
      %s164 = sphi 0, %s162
      %s165 = sphi 0, %s164
      %s179 = sphi 0, %s165
      %s183 = sphi 0, %s183
      %s185 = sphi 0, %s183
      %s186 = sphi 0, %s185
      %s200 = sphi 0, %s186
      %s204 = sphi 0, %s204
      %s206 = sphi 0, %s204
      %s207 = sphi 0, %s206
      %s221 = sphi 0, %s207
      %s227 = sphi 0, %s229
      %s230 = sphi 0, %s227
      %s231 = sphi 0, %s230
      %s247 = sphi 0, %s231
    $region4: #{tpu_custom_call.1} parent=1 // loop_header_branch
      %26 = sbr.rel (%p24) target = $region8
    $region5: #{tpu_custom_call.1} parent=1 // loop_body
      %s28 = ssub.s32 %s23, 1
      %s29 = ssub.s32 %s23, 2
      %s30 = sadd.s32 %s23, 1
      %s31 = ssub.s32 %s23, %s30
      %p32 = scmp.eq.s32.totalorder %s31, 0
      %s34 = sadd.s32 %s33, 1
      %s35 = scalar_select %p32, %s33, %s34
      %p38 = pneg %p32
      %p39 = scmp.eq.s32.totalorder %s23, 1
      %p40 = por %p38, %p39
      %p41 = scmp.ne.s32.totalorder %s33, %s36
      %p42 = scmp.eq.s32.totalorder %s23, 0
      %p43 = por %p41, %p42
      %p44 = scmp.ne.s32.totalorder %s33, %s36
      %p45 = scmp.eq.s32.totalorder %s28, 1
      %p46 = por %p44, %p45
      %p47 = scmp.ne.s32.totalorder %s36, %s37
      %p48 = scmp.eq.s32.totalorder %s28, 0
      %p49 = por %p47, %p48
      %p50 = scmp.ne.s32.totalorder %s36, %s37
      %p51 = scmp.eq.s32.totalorder %s29, 1
      %p52 = por %p50, %p51
      %p54 = scmp.ne.s32.totalorder %s37, %s53
      %p55 = scmp.eq.s32.totalorder %s29, 0
      %p56 = por %p54, %p55
      %s58 = sadd.s32 %s57, 1
      %p61 = scmp.eq.s32.totalorder %s23, 1
      %p62 = scmp.ne.s32.totalorder %s57, %s59
      %p63 = scmp.eq.s32.totalorder %s23, 0
      %p64 = por %p62, %p63
      %p65 = scmp.ne.s32.totalorder %s57, %s59
      %p66 = scmp.eq.s32.totalorder %s28, 1
      %p67 = por %p65, %p66
      %p68 = scmp.ne.s32.totalorder %s59, %s60
      %p69 = scmp.eq.s32.totalorder %s28, 0
      %p70 = por %p68, %p69
      %p71 = scmp.ne.s32.totalorder %s59, %s60
      %p72 = scmp.eq.s32.totalorder %s29, 1
      %p73 = por %p71, %p72
      %p75 = scmp.ne.s32.totalorder %s60, %s74
      %p76 = scmp.eq.s32.totalorder %s29, 0
      %p77 = por %p75, %p76
      %s79 = sadd.s32 %s78, 1
      %p82 = scmp.eq.s32.totalorder %s23, 1
      %p83 = scmp.ne.s32.totalorder %s78, %s80
      %p84 = scmp.eq.s32.totalorder %s23, 0
      %p85 = por %p83, %p84
      %p86 = scmp.ne.s32.totalorder %s78, %s80
      %p87 = scmp.eq.s32.totalorder %s28, 1
      %p88 = por %p86, %p87
      %p89 = scmp.ne.s32.totalorder %s80, %s81
      %p90 = scmp.eq.s32.totalorder %s28, 0
      %p91 = por %p89, %p90
      %p92 = scmp.ne.s32.totalorder %s80, %s81
      %p93 = scmp.eq.s32.totalorder %s29, 1
      %p94 = por %p92, %p93
      %p96 = scmp.ne.s32.totalorder %s81, %s95
      %p97 = scmp.eq.s32.totalorder %s29, 0
      %p98 = por %p96, %p97
      %s100 = sadd.s32 %s99, 1
      %p103 = scmp.eq.s32.totalorder %s23, 1
      %p104 = scmp.ne.s32.totalorder %s99, %s101
      %p105 = scmp.eq.s32.totalorder %s23, 0
      %p106 = por %p104, %p105
      %p107 = scmp.ne.s32.totalorder %s99, %s101
      %p108 = scmp.eq.s32.totalorder %s28, 1
      %p109 = por %p107, %p108
      %p110 = scmp.ne.s32.totalorder %s101, %s102
      %p111 = scmp.eq.s32.totalorder %s28, 0
      %p112 = por %p110, %p111
      %p113 = scmp.ne.s32.totalorder %s101, %s102
      %p114 = scmp.eq.s32.totalorder %s29, 1
      %p115 = por %p113, %p114
      %p117 = scmp.ne.s32.totalorder %s102, %s116
      %p118 = scmp.eq.s32.totalorder %s29, 0
      %p119 = por %p117, %p118
      %s121 = sadd.s32 %s120, 1
      %p124 = scmp.eq.s32.totalorder %s23, 1
      %p125 = scmp.ne.s32.totalorder %s120, %s122
      %p126 = scmp.eq.s32.totalorder %s23, 0
      %p127 = por %p125, %p126
      %p128 = scmp.ne.s32.totalorder %s120, %s122
      %p129 = scmp.eq.s32.totalorder %s28, 1
      %p130 = por %p128, %p129
      %p131 = scmp.ne.s32.totalorder %s122, %s123
      %p132 = scmp.eq.s32.totalorder %s28, 0
      %p133 = por %p131, %p132
      %p134 = scmp.ne.s32.totalorder %s122, %s123
      %p135 = scmp.eq.s32.totalorder %s29, 1
      %p136 = por %p134, %p135
      %p138 = scmp.ne.s32.totalorder %s123, %s137
      %p139 = scmp.eq.s32.totalorder %s29, 0
      %p140 = por %p138, %p139
      %s142 = sadd.s32 %s141, 1
      %p145 = scmp.eq.s32.totalorder %s23, 1
      %p146 = scmp.ne.s32.totalorder %s141, %s143
      %p147 = scmp.eq.s32.totalorder %s23, 0
      %p148 = por %p146, %p147
      %p149 = scmp.ne.s32.totalorder %s141, %s143
      %p150 = scmp.eq.s32.totalorder %s28, 1
      %p151 = por %p149, %p150
      %p152 = scmp.ne.s32.totalorder %s143, %s144
      %p153 = scmp.eq.s32.totalorder %s28, 0
      %p154 = por %p152, %p153
      %p155 = scmp.ne.s32.totalorder %s143, %s144
      %p156 = scmp.eq.s32.totalorder %s29, 1
      %p157 = por %p155, %p156
      %p159 = scmp.ne.s32.totalorder %s144, %s158
      %p160 = scmp.eq.s32.totalorder %s29, 0
      %p161 = por %p159, %p160
      %s163 = sadd.s32 %s162, 1
      %p166 = scmp.eq.s32.totalorder %s23, 1
      %p167 = scmp.ne.s32.totalorder %s162, %s164
      %p168 = scmp.eq.s32.totalorder %s23, 0
      %p169 = por %p167, %p168
      %p170 = scmp.ne.s32.totalorder %s162, %s164
      %p171 = scmp.eq.s32.totalorder %s28, 1
      %p172 = por %p170, %p171
      %p173 = scmp.ne.s32.totalorder %s164, %s165
      %p174 = scmp.eq.s32.totalorder %s28, 0
      %p175 = por %p173, %p174
      %p176 = scmp.ne.s32.totalorder %s164, %s165
      %p177 = scmp.eq.s32.totalorder %s29, 1
      %p178 = por %p176, %p177
      %p180 = scmp.ne.s32.totalorder %s165, %s179
      %p181 = scmp.eq.s32.totalorder %s29, 0
      %p182 = por %p180, %p181
      %s184 = sadd.s32 %s183, 1
      %p187 = scmp.eq.s32.totalorder %s23, 1
      %p188 = scmp.ne.s32.totalorder %s183, %s185
      %p189 = scmp.eq.s32.totalorder %s23, 0
      %p190 = por %p188, %p189
      %p191 = scmp.ne.s32.totalorder %s183, %s185
      %p192 = scmp.eq.s32.totalorder %s28, 1
      %p193 = por %p191, %p192
      %p194 = scmp.ne.s32.totalorder %s185, %s186
      %p195 = scmp.eq.s32.totalorder %s28, 0
      %p196 = por %p194, %p195
      %p197 = scmp.ne.s32.totalorder %s185, %s186
      %p198 = scmp.eq.s32.totalorder %s29, 1
      %p199 = por %p197, %p198
      %p201 = scmp.ne.s32.totalorder %s186, %s200
      %p202 = scmp.eq.s32.totalorder %s29, 0
      %p203 = por %p201, %p202
      %s205 = sadd.s32 %s204, 1
      %p208 = scmp.eq.s32.totalorder %s23, 1
      %p209 = scmp.ne.s32.totalorder %s204, %s206
      %p210 = scmp.eq.s32.totalorder %s23, 0
      %p211 = por %p209, %p210
      %p212 = scmp.ne.s32.totalorder %s204, %s206
      %p213 = scmp.eq.s32.totalorder %s28, 1
      %p214 = por %p212, %p213
      %p215 = scmp.ne.s32.totalorder %s206, %s207
      %p216 = scmp.eq.s32.totalorder %s28, 0
      %p217 = por %p215, %p216
      %p218 = scmp.ne.s32.totalorder %s206, %s207
      %p219 = scmp.eq.s32.totalorder %s29, 1
      %p220 = por %p218, %p219
      %p222 = scmp.ne.s32.totalorder %s207, %s221
      %p223 = scmp.eq.s32.totalorder %s29, 0
      %p224 = por %p222, %p223
      %s225 = ssub.s32 %s23, %s30
      %p226 = scmp.eq.s32.totalorder %s225, 0
      %s228 = sadd.s32 %s227, 1
      %s229 = scalar_select %p226, %s227, %s228
      %p232 = pneg %p226
      %p233 = scmp.eq.s32.totalorder %s23, 1
      %p234 = por %p232, %p233
      %p235 = scmp.ne.s32.totalorder %s227, %s230
      %p236 = scmp.eq.s32.totalorder %s23, 0
      %p237 = por %p235, %p236
      %p238 = scmp.ne.s32.totalorder %s227, %s230
      %p239 = scmp.eq.s32.totalorder %s28, 1
      %p240 = por %p238, %p239
      %p241 = scmp.ne.s32.totalorder %s230, %s231
      %p242 = scmp.eq.s32.totalorder %s28, 0
      %p243 = por %p241, %p242
      %p244 = scmp.ne.s32.totalorder %s230, %s231
      %p245 = scmp.eq.s32.totalorder %s29, 1
      %p246 = por %p244, %p245
      %p248 = scmp.ne.s32.totalorder %s231, %s247
      %p249 = scmp.eq.s32.totalorder %s29, 0
      %p250 = por %p248, %p249
      %p251 = scmp.le.s32.totalorder 1, %s23
      %p252 = scmp.lt.s32.totalorder %s23, 3
      %p253 = pnand %p251, %p252
      %p254 = pneg %p253
      // Predicated region
      $region9: #{tpu_custom_call.1} parent=5 // pred_check
        _
      $region10: #{tpu_custom_call.1} parent=5 // pred_check_branch
        %256 = sbr.rel (%p253) target = $region12
      $region11: #{tpu_custom_call.1} parent=5 // pred_region
        %s257 = ssub.s32 %s23, 1
        // Predicated region
        $region13: #{tpu_custom_call.1} parent=11 // pred_check
          %p258 = pneg %p70
        $region14: #{tpu_custom_call.1} parent=11 // pred_check_branch
          %260 = sbr.rel (%p258) target = $region16
        $region15: #{tpu_custom_call.1} parent=11 // pred_region
          %s262 = ssub.s32 1024, 1024
          %263 = vsyncadd [#allocation6], %s262
          %s264 = sshll.u32 [#allocation5], 4
          %s265 = int_to_ptr.vmem [resolvable:$true] %s264
          %270 = dma.hbm_to_vmem [thread:$0]  %s1, 1024, %s265, [#allocation6], 64, 64, 4
        $region16: #{tpu_custom_call.1} parent=11 // pred_fallthru
          _
        // Predicated region
        $region17: #{tpu_custom_call.1} parent=11 // pred_check
          %p271 = pneg %p91
        $region18: #{tpu_custom_call.1} parent=11 // pred_check_branch
          %273 = sbr.rel (%p271) target = $region20
        $region19: #{tpu_custom_call.1} parent=11 // pred_region
          _
        $region20: #{tpu_custom_call.1} parent=11 // pred_fallthru
          _
        // Predicated region
        $region21: #{tpu_custom_call.1} parent=11 // pred_check
          %p274 = pneg %p112
        $region22: #{tpu_custom_call.1} parent=11 // pred_check_branch
          %276 = sbr.rel (%p274) target = $region24
        $region23: #{tpu_custom_call.1} parent=11 // pred_region
          %s278 = ssub.s32 2048, 2048
          %279 = vsyncadd [#allocation6], %s278
          %s280 = sshll.u32 [#allocation7], 4
          %s281 = int_to_ptr.vmem [resolvable:$true] %s280
          %286 = dma.hbm_to_vmem [thread:$0]  %s3, 2048, %s281, [#allocation6], 128, 128, 8
        $region24: #{tpu_custom_call.1} parent=11 // pred_fallthru
          _
        // Predicated region
        $region25: #{tpu_custom_call.1} parent=11 // pred_check
          %p287 = pneg %p133
        $region26: #{tpu_custom_call.1} parent=11 // pred_check_branch
          %289 = sbr.rel (%p287) target = $region28
        $region27: #{tpu_custom_call.1} parent=11 // pred_region
          _
        $region28: #{tpu_custom_call.1} parent=11 // pred_fallthru
          _
        // Predicated region
        $region29: #{tpu_custom_call.1} parent=11 // pred_check
          %p290 = pneg %p154
        $region30: #{tpu_custom_call.1} parent=11 // pred_check_branch
          %292 = sbr.rel (%p290) target = $region32
        $region31: #{tpu_custom_call.1} parent=11 // pred_region
          %s294 = ssub.s32 4096, 4096
          %295 = vsyncadd [#allocation9], %s294
          %s296 = sshll.u32 [#allocation8], 4
          %s297 = int_to_ptr.vmem [resolvable:$true] %s296
          %302 = dma.hbm_to_vmem [thread:$0]  %s5, 4096, %s297, [#allocation9], 128, 128, 8
        $region32: #{tpu_custom_call.1} parent=11 // pred_fallthru
          _
        // Predicated region
        $region33: #{tpu_custom_call.1} parent=11 // pred_check
          %p303 = pneg %p175
        $region34: #{tpu_custom_call.1} parent=11 // pred_check_branch
          %305 = sbr.rel (%p303) target = $region36
        $region35: #{tpu_custom_call.1} parent=11 // pred_region
          _
        $region36: #{tpu_custom_call.1} parent=11 // pred_fallthru
          _
        // Predicated region
        $region37: #{tpu_custom_call.1} parent=11 // pred_check
          %p306 = pneg %p196
        $region38: #{tpu_custom_call.1} parent=11 // pred_check_branch
          %308 = sbr.rel (%p306) target = $region40
        $region39: #{tpu_custom_call.1} parent=11 // pred_region
          %s310 = ssub.s32 2048, 2048
          %311 = vsyncadd [#allocation9], %s310
          %s312 = sshll.u32 [#allocation10], 4
          %s313 = int_to_ptr.vmem [resolvable:$true] %s312
          %318 = dma.hbm_to_vmem [thread:$0]  %s7, 2048, %s313, [#allocation9], 64, 64, 4
        $region40: #{tpu_custom_call.1} parent=11 // pred_fallthru
          _
        // Predicated region
        $region41: #{tpu_custom_call.1} parent=11 // pred_check
          %p319 = pneg %p217
        $region42: #{tpu_custom_call.1} parent=11 // pred_check_branch
          %321 = sbr.rel (%p319) target = $region44
        $region43: #{tpu_custom_call.1} parent=11 // pred_region
          _
        $region44: #{tpu_custom_call.1} parent=11 // pred_fallthru
          _
      $region12: #{tpu_custom_call.1} parent=5 // pred_fallthru
        _
      %p322 = scmp.lt.s32.totalorder %s23, 2
      // Predicated region
      $region45: #{tpu_custom_call.1} parent=5 // pred_check
        %p323 = pneg %p322
      $region46: #{tpu_custom_call.1} parent=5 // pred_check_branch
        %325 = sbr.rel (%p323) target = $region48
      $region47: #{tpu_custom_call.1} parent=5 // pred_region
        // Predicated region
        $region49: #{tpu_custom_call.1} parent=47 // pred_check
          %p326 = pneg %p43
        $region50: #{tpu_custom_call.1} parent=47 // pred_check_branch
          %328 = sbr.rel (%p326) target = $region52
        $region51: #{tpu_custom_call.1} parent=47 // pred_region
          %s329 = sand.u32 %s33, 1
          %s330 = scalar_lea.sflag [#allocation3], %s329
          %s331 = sand.u32 %s33, 1
          %s332 = smul.addr %s331, 128
          %s333 = scalar_lea.vmem [#allocation2], %s332
          %s334 = smul.u32 16, %s23
          %s336 = ssub.s32 2048, 2048
          %337 = vsyncadd %s330, %s336
          %s338 = smul.addr %s334, 128
          %s339 = scalar_lea.hbm %s0, %s338
          %s340 = sshll.u32 %s333, 4
          %s341 = int_to_ptr.vmem [resolvable:$true] %s340
          %346 = dma.hbm_to_vmem [thread:$0]  %s339, 2048, %s341, %s330, 128, 128, 8
        $region52: #{tpu_custom_call.1} parent=47 // pred_fallthru
          _
      $region48: #{tpu_custom_call.1} parent=5 // pred_fallthru
        _
      %p347 = scmp.le.s32.totalorder 1, %s23
      %p348 = scmp.lt.s32.totalorder %s23, 3
      %p349 = pnand %p347, %p348
      %p350 = pneg %p349
      // Predicated region
      $region53: #{tpu_custom_call.1} parent=5 // pred_check
        _
      $region54: #{tpu_custom_call.1} parent=5 // pred_check_branch
        %352 = sbr.rel (%p349) target = $region56
      $region55: #{tpu_custom_call.1} parent=5 // pred_region
        %s353 = ssub.s32 %s23, 1
        %s354 = sand.u32 %s36, 1
        %s355 = scalar_lea.sflag [#allocation3], %s354
        %s356 = sand.u32 %s36, 1
        %s357 = smul.addr %s356, 128
        %s358 = scalar_lea.vmem [#allocation2], %s357
        // Predicated region
        $region57: #{tpu_custom_call.1} parent=55 // pred_check
          %p359 = pneg %p49
        $region58: #{tpu_custom_call.1} parent=55 // pred_check_branch
          %361 = sbr.rel (%p359) target = $region60
        $region59: #{tpu_custom_call.1} parent=55 // pred_region
          %362 = dma.done %s355, 2048
        $region60: #{tpu_custom_call.1} parent=55 // pred_fallthru
          _
        // Predicated region
        $region61: #{tpu_custom_call.1} parent=55 // pred_check
          %p363 = pneg %p70
        $region62: #{tpu_custom_call.1} parent=55 // pred_check_branch
          %365 = sbr.rel (%p363) target = $region64
        $region63: #{tpu_custom_call.1} parent=55 // pred_region
          %366 = dma.done [#allocation6], 1024
        $region64: #{tpu_custom_call.1} parent=55 // pred_fallthru
          _
        // Predicated region
        $region65: #{tpu_custom_call.1} parent=55 // pred_check
          %p367 = pneg %p112
        $region66: #{tpu_custom_call.1} parent=55 // pred_check_branch
          %369 = sbr.rel (%p367) target = $region68
        $region67: #{tpu_custom_call.1} parent=55 // pred_region
          %370 = dma.done [#allocation6], 2048
        $region68: #{tpu_custom_call.1} parent=55 // pred_fallthru
          _
        // Predicated region
        $region69: #{tpu_custom_call.1} parent=55 // pred_check
          %p371 = pneg %p154
        $region70: #{tpu_custom_call.1} parent=55 // pred_check_branch
          %373 = sbr.rel (%p371) target = $region72
        $region71: #{tpu_custom_call.1} parent=55 // pred_region
          %374 = dma.done [#allocation9], 4096
        $region72: #{tpu_custom_call.1} parent=55 // pred_fallthru
          _
        // Predicated region
        $region73: #{tpu_custom_call.1} parent=55 // pred_check
          %p375 = pneg %p196
        $region74: #{tpu_custom_call.1} parent=55 // pred_check_branch
          %377 = sbr.rel (%p375) target = $region76
        $region75: #{tpu_custom_call.1} parent=55 // pred_region
          %378 = dma.done [#allocation9], 2048
        $region76: #{tpu_custom_call.1} parent=55 // pred_fallthru
          _
        %s379 = sand.u32 %s36, 1
        %s380 = scalar_lea.sflag [#allocation3], %s379
        %s381 = sand.u32 %s36, 1
        %s382 = smul.addr %s381, 128
        %s383 = scalar_lea.vmem [#allocation2], %s382
        %p384 = pneg %p49
        %p385 = pneg %p46
        %p386 = pneg %p70
        %p387 = pneg %p67
        %p388 = pneg %p91
        %p389 = pneg %p88
        %p390 = pneg %p112
        %p391 = pneg %p109
        %p392 = pneg %p133
        %p393 = pneg %p130
        %p394 = pneg %p154
        %p395 = pneg %p151
        %p396 = pneg %p175
        %p397 = pneg %p172
        %p398 = pneg %p196
        %p399 = pneg %p193
        %p400 = pneg %p217
        %p401 = pneg %p214
        %p402 = pneg %p243
        %p403 = pneg %p240
        %s404 = sand.u32 %s230, 1
        %s405 = scalar_lea.sflag [#allocation4], %s404
        %s406 = sand.u32 %s230, 1
        %s407 = smul.addr %s406, 128
        %s408 = scalar_lea.vmem [#allocation11], %s407
        %s409 = smul.u32 16, %s28
        %s410 = smul.u32 16, %s28
        %v412 = vld [vmem:[%s358] sm:$0xff]
        %v413 = vld [vmem:[%s358 + $0x8] sm:$0xff]
        %v414 = vld [vmem:[%s358 + $0x10] sm:$0xff]
        %v415 = vld [vmem:[%s358 + $0x18] sm:$0xff]
        %v416 = vld [vmem:[%s358 + $0x20] sm:$0xff]
        %v417 = vld [vmem:[%s358 + $0x28] sm:$0xff]
        %v418 = vld [vmem:[%s358 + $0x30] sm:$0xff]
        %v419 = vld [vmem:[%s358 + $0x38] sm:$0xff]
        %v420 = vld [vmem:[%s358 + $0x40] sm:$0xff]
        %v421 = vld [vmem:[%s358 + $0x48] sm:$0xff]
        %v422 = vld [vmem:[%s358 + $0x50] sm:$0xff]
        %v423 = vld [vmem:[%s358 + $0x58] sm:$0xff]
        %v424 = vld [vmem:[%s358 + $0x60] sm:$0xff]
        %v425 = vld [vmem:[%s358 + $0x68] sm:$0xff]
        %v426 = vld [vmem:[%s358 + $0x70] sm:$0xff]
        %v427 = vld [vmem:[%s358 + $0x78] sm:$0xff]
        %v428 = vpack.c.bf16 %v413, %v412
        %v429 = vpack.c.bf16 %v415, %v414
        %v430 = vpack.c.bf16 %v417, %v416
        %v431 = vpack.c.bf16 %v419, %v418
        %v432 = vpack.c.bf16 %v421, %v420
        %v433 = vpack.c.bf16 %v423, %v422
        %v434 = vpack.c.bf16 %v425, %v424
        %v435 = vpack.c.bf16 %v427, %v426
        %v436 = vld [vmem:[#allocation5] sm:$0xf]
        %v437 = vld [vmem:[#allocation5 + $0x4] sm:$0xf]
        %v438 = vld [vmem:[#allocation5 + $0x8] sm:$0xf]
        %v439 = vld [vmem:[#allocation5 + $0xc] sm:$0xf]
        %v440 = vld [vmem:[#allocation5 + $0x10] sm:$0xf]
        %v441 = vld [vmem:[#allocation5 + $0x14] sm:$0xf]
        %v442 = vld [vmem:[#allocation5 + $0x18] sm:$0xf]
        %v443 = vld [vmem:[#allocation5 + $0x1c] sm:$0xf]
        %v444 = vld [vmem:[#allocation5 + $0x20] sm:$0xf]
        %v445 = vld [vmem:[#allocation5 + $0x24] sm:$0xf]
        %v446 = vld [vmem:[#allocation5 + $0x28] sm:$0xf]
        %v447 = vld [vmem:[#allocation5 + $0x2c] sm:$0xf]
        %v448 = vld [vmem:[#allocation5 + $0x30] sm:$0xf]
        %v449 = vld [vmem:[#allocation5 + $0x34] sm:$0xf]
        %v450 = vld [vmem:[#allocation5 + $0x38] sm:$0xf]
        %v451 = vld [vmem:[#allocation5 + $0x3c] sm:$0xf]
        %v452 = vld [vmem:[%s2] sm:$0x1]
        %v454 = vlaneseq
        %v455 = vshrl.u32 %v454, 7
        %v456 = vsub.s32 0, %v455
        %v457 = vrot.slane %v452, %v456
        %v475 = vunpack.c.l.b16 %v436
        %v476 = vunpack.c.l.b16 %v437
        %v477 = vunpack.c.l.b16 %v438
        %v478 = vunpack.c.l.b16 %v439
        %v479 = vunpack.c.l.b16 %v440
        %v480 = vunpack.c.l.b16 %v441
        %v481 = vunpack.c.l.b16 %v442
        %v482 = vunpack.c.l.b16 %v443
        %v483 = vunpack.c.l.b16 %v444
        %v484 = vunpack.c.l.b16 %v445
        %v485 = vunpack.c.l.b16 %v446
        %v486 = vunpack.c.l.b16 %v447
        %v487 = vunpack.c.l.b16 %v448
        %v488 = vunpack.c.l.b16 %v449
        %v489 = vunpack.c.l.b16 %v450
        %v490 = vunpack.c.l.b16 %v451
        %v491 = vpack.c.b16 %v476, %v475
        %v492 = vpack.c.b16 %v478, %v477
        %v493 = vpack.c.b16 %v480, %v479
        %v494 = vpack.c.b16 %v482, %v481
        %v495 = vpack.c.b16 %v484, %v483
        %v496 = vpack.c.b16 %v486, %v485
        %v497 = vpack.c.b16 %v488, %v487
        %v498 = vpack.c.b16 %v490, %v489
        %507 = vmatprep.subr.bf16.mxu0 0
        %508 = vmatpush1.bf16.msra.mxu0 %v491
        %509 = vmatprep.subr.bf16.mxu0 0
        %510 = vmatpush1.bf16.msra.mxu0 %v492
        %511 = vmatprep.subr.bf16.mxu0 0
        %512 = vmatpush1.bf16.msra.mxu0 %v493
        %513 = vmatprep.subr.bf16.mxu0 0
        %514 = vmatpush1.bf16.msra.mxu0 %v494
        %515 = vmatprep.subr.bf16.mxu0 0
        %516 = vmatpush1.bf16.msra.mxu0 %v495
        %517 = vmatprep.subr.bf16.mxu0 0
        %518 = vmatpush1.bf16.msra.mxu0 %v496
        %519 = vmatprep.subr.bf16.mxu0 0
        %520 = vmatpush1.bf16.msra.mxu0 %v497
        %521 = vmatprep.subr.bf16.mxu0 0
        %522 = vmatpush1.bf16.msra.mxu0 %v498
        %523 = vmatprep.subr.bf16.mxu0 0
        %524 = vmatpush1.bf16.msra.mxu0 0
        %525 = vmatprep.subr.bf16.mxu0 0
        %526 = vmatpush1.bf16.msra.mxu0 0
        %527 = vmatprep.subr.bf16.mxu0 0
        %528 = vmatpush1.bf16.msra.mxu0 0
        %529 = vmatprep.subr.bf16.mxu0 0
        %530 = vmatpush1.bf16.msra.mxu0 0
        %531 = vmatprep.subr.bf16.mxu0 0
        %532 = vmatpush1.bf16.msra.mxu0 0
        %533 = vmatprep.subr.bf16.mxu0 0
        %534 = vmatpush1.bf16.msra.mxu0 0
        %535 = vmatprep.subr.bf16.mxu0 0
        %536 = vmatpush1.bf16.msra.mxu0 0
        %537 = vmatprep.subr.bf16.mxu0 0
        %538 = vmatpush1.bf16.msra.mxu0 0
        %539 = vmatprep.mubr.bf16.mxu0 0
        %540 = vmatmul.mubr.bf16.gmra.mrb[0].mxu0 %v428
        %v541 = vpop.f32.mrb[0].mxu0
        %v542 = vadd.f32 %v457, %v541
        %v543 = vpop.f32.mrb[0].mxu0
        %v544 = vpop.f32.mrb[0].mxu0
        %v545 = vadd.f32 %v457, %v544
        %v546 = vpop.f32.mrb[0].mxu0
        %547 = vmatprep.mubr.bf16.mxu0 0
        %548 = vmatmul.mubr.bf16.gmra.mrb[0].mxu0 %v429
        %v549 = vpop.f32.mrb[0].mxu0
        %v550 = vadd.f32 %v457, %v549
        %v551 = vpop.f32.mrb[0].mxu0
        %v552 = vpop.f32.mrb[0].mxu0
        %v553 = vadd.f32 %v457, %v552
        %v554 = vpop.f32.mrb[0].mxu0
        %555 = vmatprep.mubr.bf16.mxu0 0
        %556 = vmatmul.mubr.bf16.gmra.mrb[0].mxu0 %v430
        %v557 = vpop.f32.mrb[0].mxu0
        %v558 = vadd.f32 %v457, %v557
        %v559 = vpop.f32.mrb[0].mxu0
        %v560 = vpop.f32.mrb[0].mxu0
        %v561 = vadd.f32 %v457, %v560
        %v562 = vpop.f32.mrb[0].mxu0
        %563 = vmatprep.mubr.bf16.mxu0 0
        %564 = vmatmul.mubr.bf16.gmra.mrb[0].mxu0 %v431
        %v565 = vpop.f32.mrb[0].mxu0
        %v566 = vadd.f32 %v457, %v565
        %v567 = vpop.f32.mrb[0].mxu0
        %v568 = vpop.f32.mrb[0].mxu0
        %v569 = vadd.f32 %v457, %v568
        %v570 = vpop.f32.mrb[0].mxu0
        %571 = vmatprep.mubr.bf16.mxu0 0
        %572 = vmatmul.mubr.bf16.gmra.mrb[0].mxu0 %v432
        %v573 = vpop.f32.mrb[0].mxu0
        %v574 = vadd.f32 %v457, %v573
        %v575 = vpop.f32.mrb[0].mxu0
        %v576 = vpop.f32.mrb[0].mxu0
        %v577 = vadd.f32 %v457, %v576
        %v578 = vpop.f32.mrb[0].mxu0
        %579 = vmatprep.mubr.bf16.mxu0 0
        %580 = vmatmul.mubr.bf16.gmra.mrb[0].mxu0 %v433
        %v581 = vpop.f32.mrb[0].mxu0
        %v582 = vadd.f32 %v457, %v581
        %v583 = vpop.f32.mrb[0].mxu0
        %v584 = vpop.f32.mrb[0].mxu0
        %v585 = vadd.f32 %v457, %v584
        %v586 = vpop.f32.mrb[0].mxu0
        %587 = vmatprep.mubr.bf16.mxu0 0
        %588 = vmatmul.mubr.bf16.gmra.mrb[0].mxu0 %v434
        %v589 = vpop.f32.mrb[0].mxu0
        %v590 = vadd.f32 %v457, %v589
        %v591 = vpop.f32.mrb[0].mxu0
        %v592 = vpop.f32.mrb[0].mxu0
        %v593 = vadd.f32 %v457, %v592
        %v594 = vpop.f32.mrb[0].mxu0
        %595 = vmatprep.mubr.bf16.mxu0 0
        %596 = vmatmul.mubr.bf16.gmra.mrb[0].mxu0 %v435
        %v597 = vpop.f32.mrb[0].mxu0
        %v598 = vadd.f32 %v457, %v597
        %v599 = vpop.f32.mrb[0].mxu0
        %v600 = vpop.f32.mrb[0].mxu0
        %v601 = vadd.f32 %v457, %v600
        %v602 = vpop.f32.mrb[0].mxu0
        %603 = vdwg.mxu0
        %v604 = vmax.f32 %v542, 0.0
        %v605 = vmax.f32 %v545, 0.0
        %v606 = vmax.f32 %v550, 0.0
        %v607 = vmax.f32 %v553, 0.0
        %v608 = vmax.f32 %v558, 0.0
        %v609 = vmax.f32 %v561, 0.0
        %v610 = vmax.f32 %v566, 0.0
        %v611 = vmax.f32 %v569, 0.0
        %v612 = vmax.f32 %v574, 0.0
        %v613 = vmax.f32 %v577, 0.0
        %v614 = vmax.f32 %v582, 0.0
        %v615 = vmax.f32 %v585, 0.0
        %v616 = vmax.f32 %v590, 0.0
        %v617 = vmax.f32 %v593, 0.0
        %v618 = vmax.f32 %v598, 0.0
        %v619 = vmax.f32 %v601, 0.0
        %v620 = vpack.c.bf16 %v605, %v604
        %v621 = vpack.c.bf16 %v607, %v606
        %v622 = vpack.c.bf16 %v609, %v608
        %v623 = vpack.c.bf16 %v611, %v610
        %v624 = vpack.c.bf16 %v613, %v612
        %v625 = vpack.c.bf16 %v615, %v614
        %v626 = vpack.c.bf16 %v617, %v616
        %v627 = vpack.c.bf16 %v619, %v618
        %v628 = vld [vmem:[#allocation7] sm:$0xff]
        %v629 = vld [vmem:[#allocation7 + $0x8] sm:$0xff]
        %v630 = vld [vmem:[#allocation7 + $0x10] sm:$0xff]
        %v631 = vld [vmem:[#allocation7 + $0x18] sm:$0xff]
        %v632 = vld [vmem:[#allocation7 + $0x20] sm:$0xff]
        %v633 = vld [vmem:[#allocation7 + $0x28] sm:$0xff]
        %v634 = vld [vmem:[#allocation7 + $0x30] sm:$0xff]
        %v635 = vld [vmem:[#allocation7 + $0x38] sm:$0xff]
        %v636 = vld [vmem:[#allocation7 + $0x40] sm:$0xff]
        %v637 = vld [vmem:[#allocation7 + $0x48] sm:$0xff]
        %v638 = vld [vmem:[#allocation7 + $0x50] sm:$0xff]
        %v639 = vld [vmem:[#allocation7 + $0x58] sm:$0xff]
        %v640 = vld [vmem:[#allocation7 + $0x60] sm:$0xff]
        %v641 = vld [vmem:[#allocation7 + $0x68] sm:$0xff]
        %v642 = vld [vmem:[#allocation7 + $0x70] sm:$0xff]
        %v643 = vld [vmem:[#allocation7 + $0x78] sm:$0xff]
        %v644 = vld [vmem:[%s4] sm:$0x3]
        %v646 = vlaneseq
        %v647 = vshrl.u32 %v646, 7
        %v648 = vsub.s32 0, %v647
        %v649 = vrot.slane %v644, %v648
        %v650 = vlaneseq
        %v651 = vshrl.u32 %v650, 7
        %v652 = vsub.s32 1, %v651
        %v653 = vrot.slane %v644, %v652
        %v672 = vunpack.c.l.b16 %v628
        %v673 = vunpack.c.h.b16 %v628
        %v674 = vunpack.c.l.b16 %v629
        %v675 = vunpack.c.h.b16 %v629
        %v676 = vunpack.c.l.b16 %v630
        %v677 = vunpack.c.h.b16 %v630
        %v678 = vunpack.c.l.b16 %v631
        %v679 = vunpack.c.h.b16 %v631
        %v680 = vunpack.c.l.b16 %v632
        %v681 = vunpack.c.h.b16 %v632
        %v682 = vunpack.c.l.b16 %v633
        %v683 = vunpack.c.h.b16 %v633
        %v684 = vunpack.c.l.b16 %v634
        %v685 = vunpack.c.h.b16 %v634
        %v686 = vunpack.c.l.b16 %v635
        %v687 = vunpack.c.h.b16 %v635
        %v688 = vunpack.c.l.b16 %v636
        %v689 = vunpack.c.h.b16 %v636
        %v690 = vunpack.c.l.b16 %v637
        %v691 = vunpack.c.h.b16 %v637
        %v692 = vunpack.c.l.b16 %v638
        %v693 = vunpack.c.h.b16 %v638
        %v694 = vunpack.c.l.b16 %v639
        %v695 = vunpack.c.h.b16 %v639
        %v696 = vunpack.c.l.b16 %v640
        %v697 = vunpack.c.h.b16 %v640
        %v698 = vunpack.c.l.b16 %v641
        %v699 = vunpack.c.h.b16 %v641
        %v700 = vunpack.c.l.b16 %v642
        %v701 = vunpack.c.h.b16 %v642
        %v702 = vunpack.c.l.b16 %v643
        %v703 = vunpack.c.h.b16 %v643
        %v704 = vpack.c.b16 %v674, %v672
        %v705 = vpack.c.b16 %v675, %v673
        %v706 = vpack.c.b16 %v678, %v676
        %v707 = vpack.c.b16 %v679, %v677
        %v708 = vpack.c.b16 %v682, %v680
        %v709 = vpack.c.b16 %v683, %v681
        %v710 = vpack.c.b16 %v686, %v684
        %v711 = vpack.c.b16 %v687, %v685
        %v712 = vpack.c.b16 %v690, %v688
        %v713 = vpack.c.b16 %v691, %v689
        %v714 = vpack.c.b16 %v694, %v692
        %v715 = vpack.c.b16 %v695, %v693
        %v716 = vpack.c.b16 %v698, %v696
        %v717 = vpack.c.b16 %v699, %v697
        %v718 = vpack.c.b16 %v702, %v700
        %v719 = vpack.c.b16 %v703, %v701
        %736 = vmatprep.subr.bf16.mxu0 %v705
        %737 = vmatpush1.bf16.msra.mxu0 %v704
        %738 = vmatprep.subr.bf16.mxu0 %v707
        %739 = vmatpush1.bf16.msra.mxu0 %v706
        %740 = vmatprep.subr.bf16.mxu0 %v709
        %741 = vmatpush1.bf16.msra.mxu0 %v708
        %742 = vmatprep.subr.bf16.mxu0 %v711
        %743 = vmatpush1.bf16.msra.mxu0 %v710
        %744 = vmatprep.subr.bf16.mxu0 %v713
        %745 = vmatpush1.bf16.msra.mxu0 %v712
        %746 = vmatprep.subr.bf16.mxu0 %v715
        %747 = vmatpush1.bf16.msra.mxu0 %v714
        %748 = vmatprep.subr.bf16.mxu0 %v717
        %749 = vmatpush1.bf16.msra.mxu0 %v716
        %750 = vmatprep.subr.bf16.mxu0 %v719
        %751 = vmatpush1.bf16.msra.mxu0 %v718
        %752 = vmatprep.subr.bf16.mxu0 0
        %753 = vmatpush1.bf16.msra.mxu0 0
        %754 = vmatprep.subr.bf16.mxu0 0
        %755 = vmatpush1.bf16.msra.mxu0 0
        %756 = vmatprep.subr.bf16.mxu0 0
        %757 = vmatpush1.bf16.msra.mxu0 0
        %758 = vmatprep.subr.bf16.mxu0 0
        %759 = vmatpush1.bf16.msra.mxu0 0
        %760 = vmatprep.subr.bf16.mxu0 0
        %761 = vmatpush1.bf16.msra.mxu0 0
        %762 = vmatprep.subr.bf16.mxu0 0
        %763 = vmatpush1.bf16.msra.mxu0 0
        %764 = vmatprep.subr.bf16.mxu0 0
        %765 = vmatpush1.bf16.msra.mxu0 0
        %766 = vmatprep.subr.bf16.mxu0 0
        %767 = vmatpush1.bf16.msra.mxu0 0
        %768 = vmatprep.mubr.bf16.mxu0 0
        %769 = vmatmul.mubr.bf16.gmra.mrb[0].mxu0 %v620
        %v770 = vpop.f32.mrb[0].mxu0
        %v771 = vadd.f32 %v649, %v770
        %v772 = vpop.f32.mrb[0].mxu0
        %v773 = vadd.f32 %v653, %v772
        %v774 = vpop.f32.mrb[0].mxu0
        %v775 = vadd.f32 %v649, %v774
        %v776 = vpop.f32.mrb[0].mxu0
        %v777 = vadd.f32 %v653, %v776
        %778 = vmatprep.mubr.bf16.mxu0 0
        %779 = vmatmul.mubr.bf16.gmra.mrb[0].mxu0 %v621
        %v780 = vpop.f32.mrb[0].mxu0
        %v781 = vadd.f32 %v649, %v780
        %v782 = vpop.f32.mrb[0].mxu0
        %v783 = vadd.f32 %v653, %v782
        %v784 = vpop.f32.mrb[0].mxu0
        %v785 = vadd.f32 %v649, %v784
        %v786 = vpop.f32.mrb[0].mxu0
        %v787 = vadd.f32 %v653, %v786
        %788 = vmatprep.mubr.bf16.mxu0 0
        %789 = vmatmul.mubr.bf16.gmra.mrb[0].mxu0 %v622
        %v790 = vpop.f32.mrb[0].mxu0
        %v791 = vadd.f32 %v649, %v790
        %v792 = vpop.f32.mrb[0].mxu0
        %v793 = vadd.f32 %v653, %v792
        %v794 = vpop.f32.mrb[0].mxu0
        %v795 = vadd.f32 %v649, %v794
        %v796 = vpop.f32.mrb[0].mxu0
        %v797 = vadd.f32 %v653, %v796
        %798 = vmatprep.mubr.bf16.mxu0 0
        %799 = vmatmul.mubr.bf16.gmra.mrb[0].mxu0 %v623
        %v800 = vpop.f32.mrb[0].mxu0
        %v801 = vadd.f32 %v649, %v800
        %v802 = vpop.f32.mrb[0].mxu0
        %v803 = vadd.f32 %v653, %v802
        %v804 = vpop.f32.mrb[0].mxu0
        %v805 = vadd.f32 %v649, %v804
        %v806 = vpop.f32.mrb[0].mxu0
        %v807 = vadd.f32 %v653, %v806
        %808 = vmatprep.mubr.bf16.mxu0 0
        %809 = vmatmul.mubr.bf16.gmra.mrb[0].mxu0 %v624
        %v810 = vpop.f32.mrb[0].mxu0
        %v811 = vadd.f32 %v649, %v810
        %v812 = vpop.f32.mrb[0].mxu0
        %v813 = vadd.f32 %v653, %v812
        %v814 = vpop.f32.mrb[0].mxu0
        %v815 = vadd.f32 %v649, %v814
        %v816 = vpop.f32.mrb[0].mxu0
        %v817 = vadd.f32 %v653, %v816
        %818 = vmatprep.mubr.bf16.mxu0 0
        %819 = vmatmul.mubr.bf16.gmra.mrb[0].mxu0 %v625
        %v820 = vpop.f32.mrb[0].mxu0
        %v821 = vadd.f32 %v649, %v820
        %v822 = vpop.f32.mrb[0].mxu0
        %v823 = vadd.f32 %v653, %v822
        %v824 = vpop.f32.mrb[0].mxu0
        %v825 = vadd.f32 %v649, %v824
        %v826 = vpop.f32.mrb[0].mxu0
        %v827 = vadd.f32 %v653, %v826
        %828 = vmatprep.mubr.bf16.mxu0 0
        %829 = vmatmul.mubr.bf16.gmra.mrb[0].mxu0 %v626
        %v830 = vpop.f32.mrb[0].mxu0
        %v831 = vadd.f32 %v649, %v830
        %v832 = vpop.f32.mrb[0].mxu0
        %v833 = vadd.f32 %v653, %v832
        %v834 = vpop.f32.mrb[0].mxu0
        %v835 = vadd.f32 %v649, %v834
        %v836 = vpop.f32.mrb[0].mxu0
        %v837 = vadd.f32 %v653, %v836
        %838 = vmatprep.mubr.bf16.mxu0 0
        %839 = vmatmul.mubr.bf16.gmra.mrb[0].mxu0 %v627
        %v840 = vpop.f32.mrb[0].mxu0
        %v841 = vadd.f32 %v649, %v840
        %v842 = vpop.f32.mrb[0].mxu0
        %v843 = vadd.f32 %v653, %v842
        %v844 = vpop.f32.mrb[0].mxu0
        %v845 = vadd.f32 %v649, %v844
        %v846 = vpop.f32.mrb[0].mxu0
        %v847 = vadd.f32 %v653, %v846
        %848 = vdwg.mxu0
        %v849 = vmax.f32 %v771, 0.0
        %v850 = vmax.f32 %v773, 0.0
        %v851 = vmax.f32 %v775, 0.0
        %v852 = vmax.f32 %v777, 0.0
        %v853 = vmax.f32 %v781, 0.0
        %v854 = vmax.f32 %v783, 0.0
        %v855 = vmax.f32 %v785, 0.0
        %v856 = vmax.f32 %v787, 0.0
        %v857 = vmax.f32 %v791, 0.0
        %v858 = vmax.f32 %v793, 0.0
        %v859 = vmax.f32 %v795, 0.0
        %v860 = vmax.f32 %v797, 0.0
        %v861 = vmax.f32 %v801, 0.0
        %v862 = vmax.f32 %v803, 0.0
        %v863 = vmax.f32 %v805, 0.0
        %v864 = vmax.f32 %v807, 0.0
        %v865 = vmax.f32 %v811, 0.0
        %v866 = vmax.f32 %v813, 0.0
        %v867 = vmax.f32 %v815, 0.0
        %v868 = vmax.f32 %v817, 0.0
        %v869 = vmax.f32 %v821, 0.0
        %v870 = vmax.f32 %v823, 0.0
        %v871 = vmax.f32 %v825, 0.0
        %v872 = vmax.f32 %v827, 0.0
        %v873 = vmax.f32 %v831, 0.0
        %v874 = vmax.f32 %v833, 0.0
        %v875 = vmax.f32 %v835, 0.0
        %v876 = vmax.f32 %v837, 0.0
        %v877 = vmax.f32 %v841, 0.0
        %v878 = vmax.f32 %v843, 0.0
        %v879 = vmax.f32 %v845, 0.0
        %v880 = vmax.f32 %v847, 0.0
        %v881 = vpack.c.bf16 %v851, %v849
        %v882 = vpack.c.bf16 %v852, %v850
        %v883 = vpack.c.bf16 %v855, %v853
        %v884 = vpack.c.bf16 %v856, %v854
        %v885 = vpack.c.bf16 %v859, %v857
        %v886 = vpack.c.bf16 %v860, %v858
        %v887 = vpack.c.bf16 %v863, %v861
        %v888 = vpack.c.bf16 %v864, %v862
        %v889 = vpack.c.bf16 %v867, %v865
        %v890 = vpack.c.bf16 %v868, %v866
        %v891 = vpack.c.bf16 %v871, %v869
        %v892 = vpack.c.bf16 %v872, %v870
        %v893 = vpack.c.bf16 %v875, %v873
        %v894 = vpack.c.bf16 %v876, %v874
        %v895 = vpack.c.bf16 %v879, %v877
        %v896 = vpack.c.bf16 %v880, %v878
        %v897 = vld [vmem:[#allocation8] sm:$0xff]
        %v898 = vld [vmem:[#allocation8 + $0x8] sm:$0xff]
        %v899 = vld [vmem:[#allocation8 + $0x10] sm:$0xff]
        %v900 = vld [vmem:[#allocation8 + $0x18] sm:$0xff]
        %v901 = vld [vmem:[#allocation8 + $0x20] sm:$0xff]
        %v902 = vld [vmem:[#allocation8 + $0x28] sm:$0xff]
        %v903 = vld [vmem:[#allocation8 + $0x30] sm:$0xff]
        %v904 = vld [vmem:[#allocation8 + $0x38] sm:$0xff]
        %v905 = vld [vmem:[#allocation8 + $0x40] sm:$0xff]
        %v906 = vld [vmem:[#allocation8 + $0x48] sm:$0xff]
        %v907 = vld [vmem:[#allocation8 + $0x50] sm:$0xff]
        %v908 = vld [vmem:[#allocation8 + $0x58] sm:$0xff]
        %v909 = vld [vmem:[#allocation8 + $0x60] sm:$0xff]
        %v910 = vld [vmem:[#allocation8 + $0x68] sm:$0xff]
        %v911 = vld [vmem:[#allocation8 + $0x70] sm:$0xff]
        %v912 = vld [vmem:[#allocation8 + $0x78] sm:$0xff]
        %v913 = vld [vmem:[#allocation8 + $0x80] sm:$0xff]
        %v914 = vld [vmem:[#allocation8 + $0x88] sm:$0xff]
        %v915 = vld [vmem:[#allocation8 + $0x90] sm:$0xff]
        %v916 = vld [vmem:[#allocation8 + $0x98] sm:$0xff]
        %v917 = vld [vmem:[#allocation8 + $0xa0] sm:$0xff]
        %v918 = vld [vmem:[#allocation8 + $0xa8] sm:$0xff]
        %v919 = vld [vmem:[#allocation8 + $0xb0] sm:$0xff]
        %v920 = vld [vmem:[#allocation8 + $0xb8] sm:$0xff]
        %v921 = vld [vmem:[#allocation8 + $0xc0] sm:$0xff]
        %v922 = vld [vmem:[#allocation8 + $0xc8] sm:$0xff]
        %v923 = vld [vmem:[#allocation8 + $0xd0] sm:$0xff]
        %v924 = vld [vmem:[#allocation8 + $0xd8] sm:$0xff]
        %v925 = vld [vmem:[#allocation8 + $0xe0] sm:$0xff]
        %v926 = vld [vmem:[#allocation8 + $0xe8] sm:$0xff]
        %v927 = vld [vmem:[#allocation8 + $0xf0] sm:$0xff]
        %v928 = vld [vmem:[#allocation8 + $0xf8] sm:$0xff]
        %v929 = vld [vmem:[%s6] sm:$0x3]
        %v931 = vlaneseq
        %v932 = vshrl.u32 %v931, 7
        %v933 = vsub.s32 0, %v932
        %v934 = vrot.slane %v929, %v933
        %v935 = vlaneseq
        %v936 = vshrl.u32 %v935, 7
        %v937 = vsub.s32 1, %v936
        %v938 = vrot.slane %v929, %v937
        %v973 = vunpack.c.l.b16 %v897
        %v974 = vunpack.c.h.b16 %v897
        %v975 = vunpack.c.l.b16 %v898
        %v976 = vunpack.c.h.b16 %v898
        %v977 = vunpack.c.l.b16 %v899
        %v978 = vunpack.c.h.b16 %v899
        %v979 = vunpack.c.l.b16 %v900
        %v980 = vunpack.c.h.b16 %v900
        %v981 = vunpack.c.l.b16 %v901
        %v982 = vunpack.c.h.b16 %v901
        %v983 = vunpack.c.l.b16 %v902
        %v984 = vunpack.c.h.b16 %v902
        %v985 = vunpack.c.l.b16 %v903
        %v986 = vunpack.c.h.b16 %v903
        %v987 = vunpack.c.l.b16 %v904
        %v988 = vunpack.c.h.b16 %v904
        %v989 = vunpack.c.l.b16 %v905
        %v990 = vunpack.c.h.b16 %v905
        %v991 = vunpack.c.l.b16 %v906
        %v992 = vunpack.c.h.b16 %v906
        %v993 = vunpack.c.l.b16 %v907
        %v994 = vunpack.c.h.b16 %v907
        %v995 = vunpack.c.l.b16 %v908
        %v996 = vunpack.c.h.b16 %v908
        %v997 = vunpack.c.l.b16 %v909
        %v998 = vunpack.c.h.b16 %v909
        %v999 = vunpack.c.l.b16 %v910
        %v1000 = vunpack.c.h.b16 %v910
        %v1001 = vunpack.c.l.b16 %v911
        %v1002 = vunpack.c.h.b16 %v911
        %v1003 = vunpack.c.l.b16 %v912
        %v1004 = vunpack.c.h.b16 %v912
        %v1005 = vunpack.c.l.b16 %v913
        %v1006 = vunpack.c.h.b16 %v913
        %v1007 = vunpack.c.l.b16 %v914
        %v1008 = vunpack.c.h.b16 %v914
        %v1009 = vunpack.c.l.b16 %v915
        %v1010 = vunpack.c.h.b16 %v915
        %v1011 = vunpack.c.l.b16 %v916
        %v1012 = vunpack.c.h.b16 %v916
        %v1013 = vunpack.c.l.b16 %v917
        %v1014 = vunpack.c.h.b16 %v917
        %v1015 = vunpack.c.l.b16 %v918
        %v1016 = vunpack.c.h.b16 %v918
        %v1017 = vunpack.c.l.b16 %v919
        %v1018 = vunpack.c.h.b16 %v919
        %v1019 = vunpack.c.l.b16 %v920
        %v1020 = vunpack.c.h.b16 %v920
        %v1021 = vunpack.c.l.b16 %v921
        %v1022 = vunpack.c.h.b16 %v921
        %v1023 = vunpack.c.l.b16 %v922
        %v1024 = vunpack.c.h.b16 %v922
        %v1025 = vunpack.c.l.b16 %v923
        %v1026 = vunpack.c.h.b16 %v923
        %v1027 = vunpack.c.l.b16 %v924
        %v1028 = vunpack.c.h.b16 %v924
        %v1029 = vunpack.c.l.b16 %v925
        %v1030 = vunpack.c.h.b16 %v925
        %v1031 = vunpack.c.l.b16 %v926
        %v1032 = vunpack.c.h.b16 %v926
        %v1033 = vunpack.c.l.b16 %v927
        %v1034 = vunpack.c.h.b16 %v927
        %v1035 = vunpack.c.l.b16 %v928
        %v1036 = vunpack.c.h.b16 %v928
        %v1037 = vpack.c.b16 %v975, %v973
        %v1038 = vpack.c.b16 %v976, %v974
        %v1039 = vpack.c.b16 %v979, %v977
        %v1040 = vpack.c.b16 %v980, %v978
        %v1041 = vpack.c.b16 %v983, %v981
        %v1042 = vpack.c.b16 %v984, %v982
        %v1043 = vpack.c.b16 %v987, %v985
        %v1044 = vpack.c.b16 %v988, %v986
        %v1045 = vpack.c.b16 %v991, %v989
        %v1046 = vpack.c.b16 %v992, %v990
        %v1047 = vpack.c.b16 %v995, %v993
        %v1048 = vpack.c.b16 %v996, %v994
        %v1049 = vpack.c.b16 %v999, %v997
        %v1050 = vpack.c.b16 %v1000, %v998
        %v1051 = vpack.c.b16 %v1003, %v1001
        %v1052 = vpack.c.b16 %v1004, %v1002
        %v1053 = vpack.c.b16 %v1007, %v1005
        %v1054 = vpack.c.b16 %v1008, %v1006
        %v1055 = vpack.c.b16 %v1011, %v1009
        %v1056 = vpack.c.b16 %v1012, %v1010
        %v1057 = vpack.c.b16 %v1015, %v1013
        %v1058 = vpack.c.b16 %v1016, %v1014
        %v1059 = vpack.c.b16 %v1019, %v1017
        %v1060 = vpack.c.b16 %v1020, %v1018
        %v1061 = vpack.c.b16 %v1023, %v1021
        %v1062 = vpack.c.b16 %v1024, %v1022
        %v1063 = vpack.c.b16 %v1027, %v1025
        %v1064 = vpack.c.b16 %v1028, %v1026
        %v1065 = vpack.c.b16 %v1031, %v1029
        %v1066 = vpack.c.b16 %v1032, %v1030
        %v1067 = vpack.c.b16 %v1035, %v1033
        %v1068 = vpack.c.b16 %v1036, %v1034
        %1101 = vmatprep.subr.bf16.mxu0 %v1038
        %1102 = vmatpush1.bf16.msra.mxu0 %v1037
        %1103 = vmatprep.subr.bf16.mxu0 %v1040
        %1104 = vmatpush1.bf16.msra.mxu0 %v1039
        %1105 = vmatprep.subr.bf16.mxu0 %v1042
        %1106 = vmatpush1.bf16.msra.mxu0 %v1041
        %1107 = vmatprep.subr.bf16.mxu0 %v1044
        %1108 = vmatpush1.bf16.msra.mxu0 %v1043
        %1109 = vmatprep.subr.bf16.mxu0 %v1046
        %1110 = vmatpush1.bf16.msra.mxu0 %v1045
        %1111 = vmatprep.subr.bf16.mxu0 %v1048
        %1112 = vmatpush1.bf16.msra.mxu0 %v1047
        %1113 = vmatprep.subr.bf16.mxu0 %v1050
        %1114 = vmatpush1.bf16.msra.mxu0 %v1049
        %1115 = vmatprep.subr.bf16.mxu0 %v1052
        %1116 = vmatpush1.bf16.msra.mxu0 %v1051
        %1117 = vmatprep.subr.bf16.mxu0 %v1054
        %1118 = vmatpush1.bf16.msra.mxu0 %v1053
        %1119 = vmatprep.subr.bf16.mxu0 %v1056
        %1120 = vmatpush1.bf16.msra.mxu0 %v1055
        %1121 = vmatprep.subr.bf16.mxu0 %v1058
        %1122 = vmatpush1.bf16.msra.mxu0 %v1057
        %1123 = vmatprep.subr.bf16.mxu0 %v1060
        %1124 = vmatpush1.bf16.msra.mxu0 %v1059
        %1125 = vmatprep.subr.bf16.mxu0 %v1062
        %1126 = vmatpush1.bf16.msra.mxu0 %v1061
        %1127 = vmatprep.subr.bf16.mxu0 %v1064
        %1128 = vmatpush1.bf16.msra.mxu0 %v1063
        %1129 = vmatprep.subr.bf16.mxu0 %v1066
        %1130 = vmatpush1.bf16.msra.mxu0 %v1065
        %1131 = vmatprep.subr.bf16.mxu0 %v1068
        %1132 = vmatpush1.bf16.msra.mxu0 %v1067
        %1133 = vmatprep.mubr.bf16.mxu0 %v882
        %1134 = vmatmul.mubr.bf16.gmra.mrb[0].mxu0 %v881
        %v1135 = vpop.f32.mrb[0].mxu0
        %v1136 = vadd.f32 %v934, %v1135
        %v1137 = vpop.f32.mrb[0].mxu0
        %v1138 = vadd.f32 %v938, %v1137
        %v1139 = vpop.f32.mrb[0].mxu0
        %v1140 = vadd.f32 %v934, %v1139
        %v1141 = vpop.f32.mrb[0].mxu0
        %v1142 = vadd.f32 %v938, %v1141
        %1143 = vmatprep.mubr.bf16.mxu0 %v884
        %1144 = vmatmul.mubr.bf16.gmra.mrb[0].mxu0 %v883
        %v1145 = vpop.f32.mrb[0].mxu0
        %v1146 = vadd.f32 %v934, %v1145
        %v1147 = vpop.f32.mrb[0].mxu0
        %v1148 = vadd.f32 %v938, %v1147
        %v1149 = vpop.f32.mrb[0].mxu0
        %v1150 = vadd.f32 %v934, %v1149
        %v1151 = vpop.f32.mrb[0].mxu0
        %v1152 = vadd.f32 %v938, %v1151
        %1153 = vmatprep.mubr.bf16.mxu0 %v886
        %1154 = vmatmul.mubr.bf16.gmra.mrb[0].mxu0 %v885
        %v1155 = vpop.f32.mrb[0].mxu0
        %v1156 = vadd.f32 %v934, %v1155
        %v1157 = vpop.f32.mrb[0].mxu0
        %v1158 = vadd.f32 %v938, %v1157
        %v1159 = vpop.f32.mrb[0].mxu0
        %v1160 = vadd.f32 %v934, %v1159
        %v1161 = vpop.f32.mrb[0].mxu0
        %v1162 = vadd.f32 %v938, %v1161
        %1163 = vmatprep.mubr.bf16.mxu0 %v888
        %1164 = vmatmul.mubr.bf16.gmra.mrb[0].mxu0 %v887
        %v1165 = vpop.f32.mrb[0].mxu0
        %v1166 = vadd.f32 %v934, %v1165
        %v1167 = vpop.f32.mrb[0].mxu0
        %v1168 = vadd.f32 %v938, %v1167
        %v1169 = vpop.f32.mrb[0].mxu0
        %v1170 = vadd.f32 %v934, %v1169
        %v1171 = vpop.f32.mrb[0].mxu0
        %v1172 = vadd.f32 %v938, %v1171
        %1173 = vmatprep.mubr.bf16.mxu0 %v890
        %1174 = vmatmul.mubr.bf16.gmra.mrb[0].mxu0 %v889
        %v1175 = vpop.f32.mrb[0].mxu0
        %v1176 = vadd.f32 %v934, %v1175
        %v1177 = vpop.f32.mrb[0].mxu0
        %v1178 = vadd.f32 %v938, %v1177
        %v1179 = vpop.f32.mrb[0].mxu0
        %v1180 = vadd.f32 %v934, %v1179
        %v1181 = vpop.f32.mrb[0].mxu0
        %v1182 = vadd.f32 %v938, %v1181
        %1183 = vmatprep.mubr.bf16.mxu0 %v892
        %1184 = vmatmul.mubr.bf16.gmra.mrb[0].mxu0 %v891
        %v1185 = vpop.f32.mrb[0].mxu0
        %v1186 = vadd.f32 %v934, %v1185
        %v1187 = vpop.f32.mrb[0].mxu0
        %v1188 = vadd.f32 %v938, %v1187
        %v1189 = vpop.f32.mrb[0].mxu0
        %v1190 = vadd.f32 %v934, %v1189
        %v1191 = vpop.f32.mrb[0].mxu0
        %v1192 = vadd.f32 %v938, %v1191
        %1193 = vmatprep.mubr.bf16.mxu0 %v894
        %1194 = vmatmul.mubr.bf16.gmra.mrb[0].mxu0 %v893
        %v1195 = vpop.f32.mrb[0].mxu0
        %v1196 = vadd.f32 %v934, %v1195
        %v1197 = vpop.f32.mrb[0].mxu0
        %v1198 = vadd.f32 %v938, %v1197
        %v1199 = vpop.f32.mrb[0].mxu0
        %v1200 = vadd.f32 %v934, %v1199
        %v1201 = vpop.f32.mrb[0].mxu0
        %v1202 = vadd.f32 %v938, %v1201
        %1203 = vmatprep.mubr.bf16.mxu0 %v896
        %1204 = vmatmul.mubr.bf16.gmra.mrb[0].mxu0 %v895
        %v1205 = vpop.f32.mrb[0].mxu0
        %v1206 = vadd.f32 %v934, %v1205
        %v1207 = vpop.f32.mrb[0].mxu0
        %v1208 = vadd.f32 %v938, %v1207
        %v1209 = vpop.f32.mrb[0].mxu0
        %v1210 = vadd.f32 %v934, %v1209
        %v1211 = vpop.f32.mrb[0].mxu0
        %v1212 = vadd.f32 %v938, %v1211
        %1213 = vdwg.mxu0
        %v1214 = vmax.f32 %v1136, 0.0
        %v1215 = vmax.f32 %v1138, 0.0
        %v1216 = vmax.f32 %v1140, 0.0
        %v1217 = vmax.f32 %v1142, 0.0
        %v1218 = vmax.f32 %v1146, 0.0
        %v1219 = vmax.f32 %v1148, 0.0
        %v1220 = vmax.f32 %v1150, 0.0
        %v1221 = vmax.f32 %v1152, 0.0
        %v1222 = vmax.f32 %v1156, 0.0
        %v1223 = vmax.f32 %v1158, 0.0
        %v1224 = vmax.f32 %v1160, 0.0
        %v1225 = vmax.f32 %v1162, 0.0
        %v1226 = vmax.f32 %v1166, 0.0
        %v1227 = vmax.f32 %v1168, 0.0
        %v1228 = vmax.f32 %v1170, 0.0
        %v1229 = vmax.f32 %v1172, 0.0
        %v1230 = vmax.f32 %v1176, 0.0
        %v1231 = vmax.f32 %v1178, 0.0
        %v1232 = vmax.f32 %v1180, 0.0
        %v1233 = vmax.f32 %v1182, 0.0
        %v1234 = vmax.f32 %v1186, 0.0
        %v1235 = vmax.f32 %v1188, 0.0
        %v1236 = vmax.f32 %v1190, 0.0
        %v1237 = vmax.f32 %v1192, 0.0
        %v1238 = vmax.f32 %v1196, 0.0
        %v1239 = vmax.f32 %v1198, 0.0
        %v1240 = vmax.f32 %v1200, 0.0
        %v1241 = vmax.f32 %v1202, 0.0
        %v1242 = vmax.f32 %v1206, 0.0
        %v1243 = vmax.f32 %v1208, 0.0
        %v1244 = vmax.f32 %v1210, 0.0
        %v1245 = vmax.f32 %v1212, 0.0
        %v1246 = vpack.c.bf16 %v1216, %v1214
        %v1247 = vpack.c.bf16 %v1217, %v1215
        %v1248 = vpack.c.bf16 %v1220, %v1218
        %v1249 = vpack.c.bf16 %v1221, %v1219
        %v1250 = vpack.c.bf16 %v1224, %v1222
        %v1251 = vpack.c.bf16 %v1225, %v1223
        %v1252 = vpack.c.bf16 %v1228, %v1226
        %v1253 = vpack.c.bf16 %v1229, %v1227
        %v1254 = vpack.c.bf16 %v1232, %v1230
        %v1255 = vpack.c.bf16 %v1233, %v1231
        %v1256 = vpack.c.bf16 %v1236, %v1234
        %v1257 = vpack.c.bf16 %v1237, %v1235
        %v1258 = vpack.c.bf16 %v1240, %v1238
        %v1259 = vpack.c.bf16 %v1241, %v1239
        %v1260 = vpack.c.bf16 %v1244, %v1242
        %v1261 = vpack.c.bf16 %v1245, %v1243
        %v1262 = vld [vmem:[#allocation10] sm:$0xf]
        %v1263 = vld [vmem:[#allocation10 + $0x4] sm:$0xf]
        %v1264 = vld [vmem:[#allocation10 + $0x8] sm:$0xf]
        %v1265 = vld [vmem:[#allocation10 + $0xc] sm:$0xf]
        %v1266 = vld [vmem:[#allocation10 + $0x10] sm:$0xf]
        %v1267 = vld [vmem:[#allocation10 + $0x14] sm:$0xf]
        %v1268 = vld [vmem:[#allocation10 + $0x18] sm:$0xf]
        %v1269 = vld [vmem:[#allocation10 + $0x1c] sm:$0xf]
        %v1270 = vld [vmem:[#allocation10 + $0x20] sm:$0xf]
        %v1271 = vld [vmem:[#allocation10 + $0x24] sm:$0xf]
        %v1272 = vld [vmem:[#allocation10 + $0x28] sm:$0xf]
        %v1273 = vld [vmem:[#allocation10 + $0x2c] sm:$0xf]
        %v1274 = vld [vmem:[#allocation10 + $0x30] sm:$0xf]
        %v1275 = vld [vmem:[#allocation10 + $0x34] sm:$0xf]
        %v1276 = vld [vmem:[#allocation10 + $0x38] sm:$0xf]
        %v1277 = vld [vmem:[#allocation10 + $0x3c] sm:$0xf]
        %v1278 = vld [vmem:[#allocation10 + $0x40] sm:$0xf]
        %v1279 = vld [vmem:[#allocation10 + $0x44] sm:$0xf]
        %v1280 = vld [vmem:[#allocation10 + $0x48] sm:$0xf]
        %v1281 = vld [vmem:[#allocation10 + $0x4c] sm:$0xf]
        %v1282 = vld [vmem:[#allocation10 + $0x50] sm:$0xf]
        %v1283 = vld [vmem:[#allocation10 + $0x54] sm:$0xf]
        %v1284 = vld [vmem:[#allocation10 + $0x58] sm:$0xf]
        %v1285 = vld [vmem:[#allocation10 + $0x5c] sm:$0xf]
        %v1286 = vld [vmem:[#allocation10 + $0x60] sm:$0xf]
        %v1287 = vld [vmem:[#allocation10 + $0x64] sm:$0xf]
        %v1288 = vld [vmem:[#allocation10 + $0x68] sm:$0xf]
        %v1289 = vld [vmem:[#allocation10 + $0x6c] sm:$0xf]
        %v1290 = vld [vmem:[#allocation10 + $0x70] sm:$0xf]
        %v1291 = vld [vmem:[#allocation10 + $0x74] sm:$0xf]
        %v1292 = vld [vmem:[#allocation10 + $0x78] sm:$0xf]
        %v1293 = vld [vmem:[#allocation10 + $0x7c] sm:$0xf]
        %v1294 = vld [vmem:[%s8] sm:$0x1]
        %v1296 = vlaneseq
        %v1297 = vshrl.u32 %v1296, 7
        %v1298 = vsub.s32 0, %v1297
        %v1299 = vrot.slane %v1294, %v1298
        %v1333 = vunpack.c.l.b16 %v1262
        %v1334 = vunpack.c.l.b16 %v1263
        %v1335 = vunpack.c.l.b16 %v1264
        %v1336 = vunpack.c.l.b16 %v1265
        %v1337 = vunpack.c.l.b16 %v1266
        %v1338 = vunpack.c.l.b16 %v1267
        %v1339 = vunpack.c.l.b16 %v1268
        %v1340 = vunpack.c.l.b16 %v1269
        %v1341 = vunpack.c.l.b16 %v1270
        %v1342 = vunpack.c.l.b16 %v1271
        %v1343 = vunpack.c.l.b16 %v1272
        %v1344 = vunpack.c.l.b16 %v1273
        %v1345 = vunpack.c.l.b16 %v1274
        %v1346 = vunpack.c.l.b16 %v1275
        %v1347 = vunpack.c.l.b16 %v1276
        %v1348 = vunpack.c.l.b16 %v1277
        %v1349 = vunpack.c.l.b16 %v1278
        %v1350 = vunpack.c.l.b16 %v1279
        %v1351 = vunpack.c.l.b16 %v1280
        %v1352 = vunpack.c.l.b16 %v1281
        %v1353 = vunpack.c.l.b16 %v1282
        %v1354 = vunpack.c.l.b16 %v1283
        %v1355 = vunpack.c.l.b16 %v1284
        %v1356 = vunpack.c.l.b16 %v1285
        %v1357 = vunpack.c.l.b16 %v1286
        %v1358 = vunpack.c.l.b16 %v1287
        %v1359 = vunpack.c.l.b16 %v1288
        %v1360 = vunpack.c.l.b16 %v1289
        %v1361 = vunpack.c.l.b16 %v1290
        %v1362 = vunpack.c.l.b16 %v1291
        %v1363 = vunpack.c.l.b16 %v1292
        %v1364 = vunpack.c.l.b16 %v1293
        %v1365 = vpack.c.b16 %v1334, %v1333
        %v1366 = vpack.c.b16 %v1336, %v1335
        %v1367 = vpack.c.b16 %v1338, %v1337
        %v1368 = vpack.c.b16 %v1340, %v1339
        %v1369 = vpack.c.b16 %v1342, %v1341
        %v1370 = vpack.c.b16 %v1344, %v1343
        %v1371 = vpack.c.b16 %v1346, %v1345
        %v1372 = vpack.c.b16 %v1348, %v1347
        %v1373 = vpack.c.b16 %v1350, %v1349
        %v1374 = vpack.c.b16 %v1352, %v1351
        %v1375 = vpack.c.b16 %v1354, %v1353
        %v1376 = vpack.c.b16 %v1356, %v1355
        %v1377 = vpack.c.b16 %v1358, %v1357
        %v1378 = vpack.c.b16 %v1360, %v1359
        %v1379 = vpack.c.b16 %v1362, %v1361
        %v1380 = vpack.c.b16 %v1364, %v1363
        %1397 = vmatprep.subr.bf16.mxu0 0
        %1398 = vmatpush1.bf16.msra.mxu0 %v1365
        %1399 = vmatprep.subr.bf16.mxu0 0
        %1400 = vmatpush1.bf16.msra.mxu0 %v1366
        %1401 = vmatprep.subr.bf16.mxu0 0
        %1402 = vmatpush1.bf16.msra.mxu0 %v1367
        %1403 = vmatprep.subr.bf16.mxu0 0
        %1404 = vmatpush1.bf16.msra.mxu0 %v1368
        %1405 = vmatprep.subr.bf16.mxu0 0
        %1406 = vmatpush1.bf16.msra.mxu0 %v1369
        %1407 = vmatprep.subr.bf16.mxu0 0
        %1408 = vmatpush1.bf16.msra.mxu0 %v1370
        %1409 = vmatprep.subr.bf16.mxu0 0
        %1410 = vmatpush1.bf16.msra.mxu0 %v1371
        %1411 = vmatprep.subr.bf16.mxu0 0
        %1412 = vmatpush1.bf16.msra.mxu0 %v1372
        %1413 = vmatprep.subr.bf16.mxu0 0
        %1414 = vmatpush1.bf16.msra.mxu0 %v1373
        %1415 = vmatprep.subr.bf16.mxu0 0
        %1416 = vmatpush1.bf16.msra.mxu0 %v1374
        %1417 = vmatprep.subr.bf16.mxu0 0
        %1418 = vmatpush1.bf16.msra.mxu0 %v1375
        %1419 = vmatprep.subr.bf16.mxu0 0
        %1420 = vmatpush1.bf16.msra.mxu0 %v1376
        %1421 = vmatprep.subr.bf16.mxu0 0
        %1422 = vmatpush1.bf16.msra.mxu0 %v1377
        %1423 = vmatprep.subr.bf16.mxu0 0
        %1424 = vmatpush1.bf16.msra.mxu0 %v1378
        %1425 = vmatprep.subr.bf16.mxu0 0
        %1426 = vmatpush1.bf16.msra.mxu0 %v1379
        %1427 = vmatprep.subr.bf16.mxu0 0
        %1428 = vmatpush1.bf16.msra.mxu0 %v1380
        %1429 = vmatprep.mubr.bf16.mxu0 %v1247
        %1430 = vmatmul.mubr.bf16.gmra.mrb[0].mxu0 %v1246
        %v1431 = vpop.f32.mrb[0].mxu0
        %v1432 = vadd.f32 %v1299, %v1431
        %v1433 = vpop.f32.mrb[0].mxu0
        %v1434 = vpop.f32.mrb[0].mxu0
        %v1435 = vadd.f32 %v1299, %v1434
        %v1436 = vpop.f32.mrb[0].mxu0
        %1437 = vmatprep.mubr.bf16.mxu0 %v1249
        %1438 = vmatmul.mubr.bf16.gmra.mrb[0].mxu0 %v1248
        %v1439 = vpop.f32.mrb[0].mxu0
        %v1440 = vadd.f32 %v1299, %v1439
        %v1441 = vpop.f32.mrb[0].mxu0
        %v1442 = vpop.f32.mrb[0].mxu0
        %v1443 = vadd.f32 %v1299, %v1442
        %v1444 = vpop.f32.mrb[0].mxu0
        %1445 = vmatprep.mubr.bf16.mxu0 %v1251
        %1446 = vmatmul.mubr.bf16.gmra.mrb[0].mxu0 %v1250
        %v1447 = vpop.f32.mrb[0].mxu0
        %v1448 = vadd.f32 %v1299, %v1447
        %v1449 = vpop.f32.mrb[0].mxu0
        %v1450 = vpop.f32.mrb[0].mxu0
        %v1451 = vadd.f32 %v1299, %v1450
        %v1452 = vpop.f32.mrb[0].mxu0
        %1453 = vmatprep.mubr.bf16.mxu0 %v1253
        %1454 = vmatmul.mubr.bf16.gmra.mrb[0].mxu0 %v1252
        %v1455 = vpop.f32.mrb[0].mxu0
        %v1456 = vadd.f32 %v1299, %v1455
        %v1457 = vpop.f32.mrb[0].mxu0
        %v1458 = vpop.f32.mrb[0].mxu0
        %v1459 = vadd.f32 %v1299, %v1458
        %v1460 = vpop.f32.mrb[0].mxu0
        %1461 = vmatprep.mubr.bf16.mxu0 %v1255
        %1462 = vmatmul.mubr.bf16.gmra.mrb[0].mxu0 %v1254
        %v1463 = vpop.f32.mrb[0].mxu0
        %v1464 = vadd.f32 %v1299, %v1463
        %v1465 = vpop.f32.mrb[0].mxu0
        %v1466 = vpop.f32.mrb[0].mxu0
        %v1467 = vadd.f32 %v1299, %v1466
        %v1468 = vpop.f32.mrb[0].mxu0
        %1469 = vmatprep.mubr.bf16.mxu0 %v1257
        %1470 = vmatmul.mubr.bf16.gmra.mrb[0].mxu0 %v1256
        %v1471 = vpop.f32.mrb[0].mxu0
        %v1472 = vadd.f32 %v1299, %v1471
        %v1473 = vpop.f32.mrb[0].mxu0
        %v1474 = vpop.f32.mrb[0].mxu0
        %v1475 = vadd.f32 %v1299, %v1474
        %v1476 = vpop.f32.mrb[0].mxu0
        %1477 = vmatprep.mubr.bf16.mxu0 %v1259
        %1478 = vmatmul.mubr.bf16.gmra.mrb[0].mxu0 %v1258
        %v1479 = vpop.f32.mrb[0].mxu0
        %v1480 = vadd.f32 %v1299, %v1479
        %v1481 = vpop.f32.mrb[0].mxu0
        %v1482 = vpop.f32.mrb[0].mxu0
        %v1483 = vadd.f32 %v1299, %v1482
        %v1484 = vpop.f32.mrb[0].mxu0
        %1485 = vmatprep.mubr.bf16.mxu0 %v1261
        %1486 = vmatmul.mubr.bf16.gmra.mrb[0].mxu0 %v1260
        %v1487 = vpop.f32.mrb[0].mxu0
        %v1488 = vadd.f32 %v1299, %v1487
        %v1489 = vpop.f32.mrb[0].mxu0
        %v1490 = vpop.f32.mrb[0].mxu0
        %v1491 = vadd.f32 %v1299, %v1490
        %v1492 = vpop.f32.mrb[0].mxu0
        %1493 = vdwg.mxu0
        %1494 = vst [vmem:[%s408] sm:$0xff] %v1432
        %1495 = vst [vmem:[%s408 + $0x8] sm:$0xff] %v1435
        %1496 = vst [vmem:[%s408 + $0x10] sm:$0xff] %v1440
        %1497 = vst [vmem:[%s408 + $0x18] sm:$0xff] %v1443
        %1498 = vst [vmem:[%s408 + $0x20] sm:$0xff] %v1448
        %1499 = vst [vmem:[%s408 + $0x28] sm:$0xff] %v1451
        %1500 = vst [vmem:[%s408 + $0x30] sm:$0xff] %v1456
        %1501 = vst [vmem:[%s408 + $0x38] sm:$0xff] %v1459
        %1502 = vst [vmem:[%s408 + $0x40] sm:$0xff] %v1464
        %1503 = vst [vmem:[%s408 + $0x48] sm:$0xff] %v1467
        %1504 = vst [vmem:[%s408 + $0x50] sm:$0xff] %v1472
        %1505 = vst [vmem:[%s408 + $0x58] sm:$0xff] %v1475
        %1506 = vst [vmem:[%s408 + $0x60] sm:$0xff] %v1480
        %1507 = vst [vmem:[%s408 + $0x68] sm:$0xff] %v1483
        %1508 = vst [vmem:[%s408 + $0x70] sm:$0xff] %v1488
        %1509 = vst [vmem:[%s408 + $0x78] sm:$0xff] %v1491
        %s1510 = sand.u32 %s230, 1
        %s1511 = scalar_lea.sflag [#allocation4], %s1510
        %s1512 = sand.u32 %s230, 1
        %s1513 = smul.addr %s1512, 128
        %s1514 = scalar_lea.vmem [#allocation11], %s1513
        // Predicated region
        $region77: #{tpu_custom_call.1} parent=55 // pred_check
          %p1515 = pneg %p240
        $region78: #{tpu_custom_call.1} parent=55 // pred_check_branch
          %1517 = sbr.rel (%p1515) target = $region80
        $region79: #{tpu_custom_call.1} parent=55 // pred_region
          %s1518 = smul.u32 16, %s28
          %s1520 = ssub.s32 2048, 2048
          %1521 = vsyncadd %s1511, %s1520
          %s1522 = smul.addr %s1518, 128
          %s1523 = scalar_lea.hbm %s9, %s1522
          %s1524 = sshll.u32 %s1514, 4
          %s1525 = int_to_ptr.vmem [resolvable:$true] %s1524
          %1530 = dma.vmem_to_hbm [thread:$0]  %s1525, 2048, %s1523, %s1511, 128, 128, 8
        $region80: #{tpu_custom_call.1} parent=55 // pred_fallthru
          _
      $region56: #{tpu_custom_call.1} parent=5 // pred_fallthru
        _
      %p1531 = scmp.le.s32.totalorder 2, %s23
      // Predicated region
      $region81: #{tpu_custom_call.1} parent=5 // pred_check
        %p1532 = pneg %p1531
      $region82: #{tpu_custom_call.1} parent=5 // pred_check_branch
        %1534 = sbr.rel (%p1532) target = $region84
      $region83: #{tpu_custom_call.1} parent=5 // pred_region
        %s1535 = ssub.s32 %s23, 2
        // Predicated region
        $region85: #{tpu_custom_call.1} parent=83 // pred_check
          %p1536 = pneg %p246
        $region86: #{tpu_custom_call.1} parent=83 // pred_check_branch
          %1538 = sbr.rel (%p1536) target = $region88
        $region87: #{tpu_custom_call.1} parent=83 // pred_region
          %s1539 = sand.u32 %s231, 1
          %s1540 = scalar_lea.sflag [#allocation4], %s1539
          %s1541 = sand.u32 %s231, 1
          %s1542 = smul.addr %s1541, 128
          %s1543 = scalar_lea.vmem [#allocation11], %s1542
          %1544 = dma.done %s1540, 2048
        $region88: #{tpu_custom_call.1} parent=83 // pred_fallthru
          _
      $region84: #{tpu_custom_call.1} parent=5 // pred_fallthru
        _
    $region6: #{tpu_custom_call.1} parent=1 // loop_footer
      %s27 = sadd.s32 1, %s23
    $region7: #{tpu_custom_call.1} parent=1 // loop_footer_branch
      %22 = sbr.rel target = $region3
    $region8: #{tpu_custom_call.1} parent=1 // loop_exit
      _
    %1545 = vsyncpa [#allocation3], 1
    %s1546 = scalar_lea.sflag [#allocation3], 1
    %1547 = vsyncpa %s1546, 1
    %1548 = vsyncpa [#allocation6], 1
    %1549 = vsyncpa [#allocation9], 1
    %1550 = vsyncpa [#allocation4], 1
    %s1551 = scalar_lea.sflag [#allocation4], 1
    %1552 = vsyncpa %s1551, 1

</llo_original>
